<compile_context>
chip_gen: v7x
topology: tpu7x:2x2x1
jax: 0.10.0
libtpu: 0.0.40
codegen_flags: <defaults>
</compile_context>

<pallas_src>
import math

import jax
import jax.numpy as jnp
from jax import lax
from jax.experimental import pallas as pl
from jax.experimental.pallas import tpu as pltpu

LAYERS = 3   # Encoder(..., layers=3)
KSIZE = 3    # Encoder(..., ksize=3)

_LANE = 128
_SUBLANE = 8
# Sizing budget for the per-step working set (activations + weights).  Chosen
# conservatively so the same tiling fits v7x (64 MiB physical / 32 MiB scoped
# VMEM) as well as v5e/v6e; the explicit vmem limit below leaves headroom.
_VMEM_SIZING_BUDGET = 20 * 1024 * 1024
_VMEM_LIMIT_BYTES = 32 * 1024 * 1024
# Approx. number of live (R, C_pad)-sized f32-equivalent buffers per grid step
# (double-buffered I/O blocks, x copy, 2 masks, stacked bf16 LHS, y0/hf/hg/f/g).
_ACT_F32_COPIES = 18


def _round_up(x, m):
    return (x + m - 1) // m * m


def _make_kernel(seq_len, c_pad):
    """Encoder kernel for fixed per-batch sequence length T and padded C."""
    T, Cp, K = seq_len, c_pad, KSIZE

    def kernel(x_ref, w0_ref, b0_ref, wf_ref, bf_ref, wg_ref, bg_ref, o_ref):
        # x_ref : (R, Cp) f32, R = block_n * T (batch-major row blocks)
        # w0_ref: (K*Cp, 2Cp) bf16   fused layer-0 weight for both TCN paths
        # b0_ref: (1, 2Cp)    f32    fused layer-0 bias
        # w*_ref: (L-1, K*Cp, Cp) bf16  remaining per-path tap-folded weights
        # b*_ref: (L-1, 1, Cp)    f32   remaining per-path biases
        # o_ref : (R, Cp) f32 (lane-dense store: Cp % 128 == 0)
        R = x_ref.shape[0]
        x = x_ref[...]                                         # f32

        # Causal row masks, hoisted: time position of each row inside its
        # batch segment, pre-broadcast once to (R, Cp) as f32 0/1 multipliers.
        t_pos = lax.broadcasted_iota(jnp.int32, (R, Cp), 0) % T
        masks = [None] + [jnp.where(t_pos >= s, 1.0, 0.0) for s in range(1, K)]

        def shifted_stack(h):
            # (R, Cp) f32 -> (R, K*Cp) bf16; column block k holds h delayed in
            # time by s = K-1-k rows (zeros entering at the start of each
            # length-T batch segment).  Rolls are XLU sublane rotations; the
            # mask multiply replaces per-tap jnp.where selects; the concat is
            # lane-aligned because Cp is a multiple of 128.
            pieces = []
            for k in range(K):
                s = K - 1 - k
                if s == 0:
                    pieces.append(h.astype(jnp.bfloat16))
                else:
                    rolled = pltpu.roll(h, shift=s, axis=0)     # f32 roll
                    pieces.append((rolled * masks[s]).astype(jnp.bfloat16))
            return jnp.concatenate(pieces, axis=1)

        # ---- fused first layer (both paths consume the same x): 1 matmul ----
        y0 = jnp.dot(shifted_stack(x), w0_ref[...],
                     preferred_element_type=jnp.float32) + b0_ref[...]
        hf = y0[:, :Cp]
        hg = y0[:, Cp:]

        # ---- remaining layers: one bf16 MXU matmul per layer per path ----
        for l in range(LAYERS - 1):
            hf = jnp.dot(shifted_stack(hf), wf_ref[l],
                         preferred_element_type=jnp.float32) + bf_ref[l]
            hg = jnp.dot(shifted_stack(hg), wg_ref[l],
                         preferred_element_type=jnp.float32) + bg_ref[l]

        # f32 epilogue (v5e VPU/EUP have no bf16 path).
        f = jax.nn.sigmoid(hf)
        g = jnp.tanh(hg)
        o_ref[...] = (x + f * g).astype(o_ref.dtype)

    return kernel


def _choose_block_n(n, t, c_pad, weight_bytes):
    """VMEM-aware batch fold.

    Pick the largest divisor bn of N whose per-step working set
    (~_ACT_F32_COPIES f32 copies of the (bn*T, C_pad) block plus the
    single-buffered weights) fits the sizing budget, subject to the BlockSpec
    row constraint ((bn*T) % 8 == 0 or bn == N), preferring >= 4 grid steps
    (>= 2 per TensorCore on v7x) and an even step count.
    """
    row_bytes = _ACT_F32_COPIES * c_pad * 4
    budget = max(_VMEM_SIZING_BUDGET - weight_bytes, row_bytes * t)
    bn_cap = max(1, budget // (row_bytes * t))

    divisors = [d for d in range(1, n + 1) if n % d == 0]
    ok_rows = lambda bn: (bn * t) % _SUBLANE == 0 or bn == n
    feasible = [bn for bn in divisors if bn <= bn_cap and ok_rows(bn)]
    if not feasible:
        # No legal block fits the sizing budget (extreme T * C_pad); take the
        # smallest legal one and rely on the explicit vmem limit / compiler.
        return min(bn for bn in divisors if ok_rows(bn))

    def best(cands):
        even = [bn for bn in cands if (n // bn) % 2 == 0]
        return max(even) if even else max(cands)

    for min_steps in (4, 2):
        cands = [bn for bn in feasible if n // bn >= min_steps]
        if cands:
            return best(cands)
    return max(feasible)


def prepare_encoder_params(wf, bf, wg, bg, c):
    """Fold torch Conv1d weights into MXU-ready, lane-padded bf16 matrices.

    wf/wg: (L, C_out, C_in, K); bf/bg: (L, C_out).  Returns (c_pad, params).
    """
    L, K = wf.shape[0], wf.shape[-1]
    cp = _round_up(c, _LANE)

    def fold(w):
        wp = jnp.pad(w, ((0, 0), (0, cp - c), (0, cp - c), (0, 0)))
        # (L, Cout, Cin, K) -> (L, K, Cin, Cout) -> (L, K*Cp, Cp): one matmul
        # covers all K taps, LHS columns laid out as [tap0 | tap1 | tap2].
        return jnp.transpose(wp, (0, 3, 2, 1)).reshape(L, K * cp, cp)

    def padb(b):
        return jnp.pad(b, ((0, 0), (0, cp - c)))

    wf2, wg2 = fold(wf), fold(wg)
    bf2, bg2 = padb(bf), padb(bg)

    # Layer-0 fusion: both paths read the same x -> one (K*Cp, 2Cp) matmul.
    w0 = jnp.concatenate([wf2[0], wg2[0]], axis=-1).astype(jnp.bfloat16)
    b0 = jnp.concatenate([bf2[0], bg2[0]], axis=-1)[None, :]          # f32
    wf_r = wf2[1:].astype(jnp.bfloat16)                               # (L-1, K*Cp, Cp)
    wg_r = wg2[1:].astype(jnp.bfloat16)
    bf_r = bf2[1:, None, :]                                           # (L-1, 1, Cp) f32
    bg_r = bg2[1:, None, :]
    return cp, (w0, b0, wf_r, bf_r, wg_r, bg_r)


def _encoder_padded_rows(x2d, params, n, t, cp, block_n):
    """Core call: x2d is (N*T, C_pad) f32, batch-major rows."""
    w0, b0, wf_r, bf_r, wg_r, bg_r = params
    weight_bytes = sum(int(a.size) * a.dtype.itemsize for a in params)

    bn = block_n if block_n is not None else _choose_block_n(n, t, cp, weight_bytes)
    assert n % bn == 0, f"block_n={bn} must divide N={n}"
    rows = bn * t
    assert rows % _SUBLANE == 0 or bn == n, (
        f"block rows {rows} must be a multiple of {_SUBLANE} (or bn == N)")
    grid_n = n // bn
    L, K = LAYERS, KSIZE

    # Grid-invariant weights/biases: single-buffered (no dead VMEM copy).
    def wspec(shape, imap):
        return pl.BlockSpec(shape, imap, pipeline_mode=pl.Buffered(1))

    return pl.pallas_call(
        _make_kernel(t, cp),
        out_shape=jax.ShapeDtypeStruct((n * t, cp), x2d.dtype),
        grid_spec=pltpu.PrefetchScalarGridSpec(
            num_scalar_prefetch=0,
            grid=(grid_n,),
            in_specs=[
                pl.BlockSpec((rows, cp), lambda i: (i, 0)),
                wspec((K * cp, 2 * cp), lambda i: (0, 0)),
                wspec((1, 2 * cp), lambda i: (0, 0)),
                wspec((L - 1, K * cp, cp), lambda i: (0, 0, 0)),
                wspec((L - 1, 1, cp), lambda i: (0, 0, 0)),
                wspec((L - 1, K * cp, cp), lambda i: (0, 0, 0)),
                wspec((L - 1, 1, cp), lambda i: (0, 0, 0)),
            ],
            out_specs=pl.BlockSpec((rows, cp), lambda i: (i, 0)),
        ),
        compiler_params=pltpu.CompilerParams(
            dimension_semantics=("parallel",),
            vmem_limit_bytes=_VMEM_LIMIT_BYTES),
        input_output_aliases={0: 0},    # output reuses the input HBM buffer
    )(x2d, w0, b0, wf_r, bf_r, wg_r, bg_r)


def encoder_pallas_ntc(x_ntc, wf, bf, wg, bg, *, block_n=None):
    """Channels-last entry point: x_ntc is (N, T, C); returns (N, T, C).

    Pads C up to a multiple of 128 lanes (zero-padded channels stay exactly 0),
    flattens batch into rows, runs the kernel, and slices the pad back off.
    Callers that keep an (N, T, C_pad) activation layout (e.g. EncoderBlock's
    chain of 3 Encoders) avoid the pad/slice copies entirely.
    """
    N, T, C = x_ntc.shape
    L, K = wf.shape[0], wf.shape[-1]
    assert (L, K) == (LAYERS, KSIZE)
    assert wf.shape[1] == wf.shape[2] == C and wg.shape == wf.shape

    cp, params = prepare_encoder_params(wf, bf, wg, bg, C)
    x_pad = x_ntc if cp == C else jnp.pad(x_ntc, ((0, 0), (0, 0), (0, cp - C)))
    out2d = _encoder_padded_rows(x_pad.reshape(N * T, cp), params, N, T, cp, block_n)
    out = out2d.reshape(N, T, cp)
    return out if cp == C else out[..., :C]


def encoder_pallas(x_nct, wf, bf, wg, bg, *, block_n=None):
    """PyTorch-interface wrapper: x_nct is (N, C, T) NCW (Conv1d layout).

    The transpose here only adapts the torch layout and is fused by XLA with
    the channel pad into a single relayout copy in each direction; inside
    GraphTCN the surrounding ops should stay channels-last and call
    encoder_pallas_ntc directly so this copy is not paid per Encoder.
    """
    x_ntc = jnp.transpose(x_nct, (0, 2, 1))                 # (N, T, C)
    out = encoder_pallas_ntc(x_ntc, wf, bf, wg, bg, block_n=block_n)
    return jnp.transpose(out, (0, 2, 1))                    # back to (N, C, T)


# ---------------- pure-JAX reference (mirrors the PyTorch forward) -----------
def _conv1d_causal_ref(x, w, b):
    # x: (N, C_in, T); w: (C_out, C_in, K); b: (C_out,)
    K = w.shape[-1]
    xp = jnp.pad(x, ((0, 0), (0, 0), (K - 1, 0)))
    y = lax.conv_general_dilated(
        xp, w, window_strides=(1,), padding="VALID",
        dimension_numbers=("NCH", "OIH", "NCH"),
        precision=lax.Precision.HIGHEST)
    return y + b[None, :, None]


def encoder_ref(x, wf, bf, wg, bg):
    def tcn(h, w, b):
        for l in range(LAYERS):
            h = _conv1d_causal_ref(h, w[l], b[l])
        return h
    f = jax.nn.sigmoid(tcn(x, wf, bf))
    g = jnp.tanh(tcn(x, wg, bg))
    return x + f * g


if __name__ == "__main__":
    # Shapes consistent with GraphTCN's EncoderBlock usage:
    #   C = fout + n_units[-1] = 32 + 16 = 48 channels, T = obs_len = 12.
    # N=8 with the VMEM-aware heuristic gives block_n=2 -> a 4-step parallel
    # grid, exercising both the batch fold (causal mask at a batch boundary
    # inside a block) and multi-step pipelining.
    N, C, T = 8, 48, 12

    key = jax.random.PRNGKey(0)
    kx, kwf, kbf, kwg, kbg = jax.random.split(key, 5)

    x = jax.random.normal(kx, (N, C, T), dtype=jnp.float32)

    # Deterministic Conv1d-style init: uniform(-1/sqrt(C*K), 1/sqrt(C*K)).
    bound = 1.0 / math.sqrt(C * KSIZE)
    wf = jax.random.uniform(kwf, (LAYERS, C, C, KSIZE), jnp.float32, -bound, bound)
    bf = jax.random.uniform(kbf, (LAYERS, C), jnp.float32, -bound, bound)
    wg = jax.random.uniform(kwg, (LAYERS, C, C, KSIZE), jnp.float32, -bound, bound)
    bg = jax.random.uniform(kbg, (LAYERS, C), jnp.float32, -bound, bound)

    out = jax.jit(encoder_pallas)(x, wf, bf, wg, bg)
    out = jax.block_until_ready(out)

    ref = encoder_ref(x, wf, bf, wg, bg)
    assert out.shape == (N, C, T)
    err = float(jnp.max(jnp.abs(out - ref)))
    # bf16 MXU operands with f32 accumulation vs an all-f32 reference:
    # tolerance relaxed accordingly (accumulation stays f32, error bounded).
    assert err < 3e-2, f"mismatch vs reference: max abs err = {err}"

    print("KERNEL_OK")
</pallas_src>

<mosaic_0001>
module attributes {stable_mosaic.version = 11 : i64} {
  func.func @kernel(%arg0: i32, %arg1: memref<24x128xf32, #tpu.memory_space<vmem>>, %arg2: memref<384x256xbf16, #tpu.memory_space<vmem>>, %arg3: memref<1x256xf32, #tpu.memory_space<vmem>>, %arg4: memref<2x384x128xbf16, #tpu.memory_space<vmem>>, %arg5: memref<2x1x128xf32, #tpu.memory_space<vmem>>, %arg6: memref<2x384x128xbf16, #tpu.memory_space<vmem>>, %arg7: memref<2x1x128xf32, #tpu.memory_space<vmem>>, %arg8: memref<24x128xf32, #tpu.memory_space<vmem>>) attributes {dimension_semantics = [#tpu.dimension_semantics<parallel>], iteration_bounds = array<i64: 4>, scalar_prefetch = 0 : i64, scratch_operands = 0 : i64, tpu.core_type = #tpu.core_type<tc>, window_params = [{transform_indices = @transform_0, window_bounds = array<i64: 24, 128>}, {pipeline_mode = #tpu.pipeline_mode<synchronous>, transform_indices = @transform_1, window_bounds = array<i64: 384, 256>}, {pipeline_mode = #tpu.pipeline_mode<synchronous>, transform_indices = @transform_2, window_bounds = array<i64: 1, 256>}, {pipeline_mode = #tpu.pipeline_mode<synchronous>, transform_indices = @transform_3, window_bounds = array<i64: 2, 384, 128>}, {pipeline_mode = #tpu.pipeline_mode<synchronous>, transform_indices = @transform_4, window_bounds = array<i64: 2, 1, 128>}, {pipeline_mode = #tpu.pipeline_mode<synchronous>, transform_indices = @transform_5, window_bounds = array<i64: 2, 384, 128>}, {pipeline_mode = #tpu.pipeline_mode<synchronous>, transform_indices = @transform_6, window_bounds = array<i64: 2, 1, 128>}, {transform_indices = @transform_7, window_bounds = array<i64: 24, 128>}]} {
    %c0 = arith.constant 0 : index
    %c0_0 = arith.constant 0 : index
    %0 = vector.load %arg1[%c0, %c0_0] : memref<24x128xf32, #tpu.memory_space<vmem>>, vector<24x128xf32>
    %1 = tpu.iota {dimensions = array<i32: 0>} : vector<24x128xi32>
    %c12_i32 = arith.constant 12 : i32
    %c0_i32 = arith.constant 0 : i32
    %2 = arith.cmpi eq, %c12_i32, %c0_i32 : i32
    %c1_i32 = arith.constant 1 : i32
    %3 = arith.select %2, %c1_i32, %c12_i32 : i32
    %4 = vector.broadcast %3 : i32 to vector<24x128xi32>
    %5 = arith.remsi %1, %4 : vector<24x128xi32>
    %c0_i32_1 = arith.constant 0 : i32
    %6 = vector.broadcast %c0_i32_1 : i32 to vector<24x128xi32>
    %7 = arith.cmpi ne, %5, %6 : vector<24x128xi32>
    %c0_i32_2 = arith.constant 0 : i32
    %8 = vector.broadcast %c0_i32_2 : i32 to vector<24x128xi32>
    %9 = arith.cmpi slt, %5, %8 : vector<24x128xi32>
    %c0_i32_3 = arith.constant 0 : i32
    %10 = arith.cmpi slt, %3, %c0_i32_3 : i32
    %11 = vector.broadcast %10 : i1 to vector<24x128xi1>
    %12 = vector.broadcast %11 : vector<24x128xi1> to vector<24x128xi1>
    %13 = arith.xori %9, %12 : vector<24x128xi1>
    %14 = arith.andi %13, %7 : vector<24x128xi1>
    %15 = vector.broadcast %3 : i32 to vector<24x128xi32>
    %16 = arith.addi %5, %15 : vector<24x128xi32>
    %17 = arith.select %14, %16, %5 : vector<24x128xi1>, vector<24x128xi32>
    %c1_i32_4 = arith.constant 1 : i32
    %18 = vector.broadcast %c1_i32_4 : i32 to vector<24x128xi32>
    %19 = arith.cmpi sge, %17, %18 : vector<24x128xi32>
    %cst = arith.constant 1.000000e+00 : f32
    %cst_5 = arith.constant 0.000000e+00 : f32
    %20 = vector.broadcast %cst : f32 to vector<24x128xf32>
    %21 = vector.broadcast %cst_5 : f32 to vector<24x128xf32>
    %22 = arith.select %19, %20, %21 : vector<24x128xi1>, vector<24x128xf32>
    %c2_i32 = arith.constant 2 : i32
    %23 = vector.broadcast %c2_i32 : i32 to vector<24x128xi32>
    %24 = arith.cmpi sge, %17, %23 : vector<24x128xi32>
    %cst_6 = arith.constant 1.000000e+00 : f32
    %cst_7 = arith.constant 0.000000e+00 : f32
    %25 = vector.broadcast %cst_6 : f32 to vector<24x128xf32>
    %26 = vector.broadcast %cst_7 : f32 to vector<24x128xf32>
    %27 = arith.select %24, %25, %26 : vector<24x128xi1>, vector<24x128xf32>
    %c2_i32_8 = arith.constant 2 : i32
    %28 = tpu.dynamic_rotate %0 by %c2_i32_8 dim 0 : vector<24x128xf32>, i32 -> vector<24x128xf32>
    %29 = arith.mulf %28, %27 : vector<24x128xf32>
    %30 = arith.truncf %29 : vector<24x128xf32> to vector<24x128xbf16>
    %c1_i32_9 = arith.constant 1 : i32
    %31 = tpu.dynamic_rotate %0 by %c1_i32_9 dim 0 : vector<24x128xf32>, i32 -> vector<24x128xf32>
    %32 = arith.mulf %31, %22 : vector<24x128xf32>
    %33 = arith.truncf %32 : vector<24x128xf32> to vector<24x128xbf16>
    %34 = arith.truncf %0 : vector<24x128xf32> to vector<24x128xbf16>
    %35 = tpu.concatenate %30, %33, %34 in 1 : vector<24x128xbf16>, vector<24x128xbf16>, vector<24x128xbf16> -> vector<24x384xbf16>
    %c0_10 = arith.constant 0 : index
    %c0_11 = arith.constant 0 : index
    %36 = vector.load %arg2[%c0_10, %c0_11] : memref<384x256xbf16, #tpu.memory_space<vmem>>, vector<384x256xbf16>
    %cst_12 = arith.constant dense<0.000000e+00> : vector<24x256xf32>
    %37 = tpu.matmul %35, %36, %cst_12 {dimension_numbers = #tpu.dot_dimension_numbers<[1], [0], [0], [1], [0, 0, 1, 1], [], []>} : vector<24x384xbf16>, vector<384x256xbf16>, vector<24x256xf32> -> vector<24x256xf32>
    %c0_13 = arith.constant 0 : index
    %c0_14 = arith.constant 0 : index
    %38 = vector.load %arg3[%c0_13, %c0_14] : memref<1x256xf32, #tpu.memory_space<vmem>>, vector<1x256xf32>
    %39 = vector.broadcast %38 : vector<1x256xf32> to vector<24x256xf32>
    %40 = arith.addf %37, %39 : vector<24x256xf32>
    %41 = vector.extract_strided_slice %40 {offsets = [0, 0], sizes = [24, 128], strides = [1, 1]} : vector<24x256xf32> to vector<24x128xf32>
    %42 = vector.extract_strided_slice %40 {offsets = [0, 128], sizes = [24, 128], strides = [1, 1]} : vector<24x256xf32> to vector<24x128xf32>
    %c2_i32_15 = arith.constant 2 : i32
    %43 = tpu.dynamic_rotate %41 by %c2_i32_15 dim 0 : vector<24x128xf32>, i32 -> vector<24x128xf32>
    %44 = arith.mulf %43, %27 : vector<24x128xf32>
    %45 = arith.truncf %44 : vector<24x128xf32> to vector<24x128xbf16>
    %c1_i32_16 = arith.constant 1 : i32
    %46 = tpu.dynamic_rotate %41 by %c1_i32_16 dim 0 : vector<24x128xf32>, i32 -> vector<24x128xf32>
    %47 = arith.mulf %46, %22 : vector<24x128xf32>
    %48 = arith.truncf %47 : vector<24x128xf32> to vector<24x128xbf16>
    %49 = arith.truncf %41 : vector<24x128xf32> to vector<24x128xbf16>
    %50 = tpu.concatenate %45, %48, %49 in 1 : vector<24x128xbf16>, vector<24x128xbf16>, vector<24x128xbf16> -> vector<24x384xbf16>
    %c0_17 = arith.constant 0 : index
    %c0_18 = arith.constant 0 : index
    %c0_19 = arith.constant 0 : index
    %51 = vector.load %arg4[%c0_17, %c0_18, %c0_19] : memref<2x384x128xbf16, #tpu.memory_space<vmem>>, vector<1x384x128xbf16>
    %52 = vector.shape_cast %51 : vector<1x384x128xbf16> to vector<384x128xbf16>
    %cst_20 = arith.constant dense<0.000000e+00> : vector<24x128xf32>
    %53 = tpu.matmul %50, %52, %cst_20 {dimension_numbers = #tpu.dot_dimension_numbers<[1], [0], [0], [1], [0, 0, 1, 1], [], []>} : vector<24x384xbf16>, vector<384x128xbf16>, vector<24x128xf32> -> vector<24x128xf32>
    %c0_21 = arith.constant 0 : index
    %c0_22 = arith.constant 0 : index
    %c0_23 = arith.constant 0 : index
    %54 = vector.load %arg5[%c0_21, %c0_22, %c0_23] : memref<2x1x128xf32, #tpu.memory_space<vmem>>, vector<1x1x128xf32>
    %55 = vector.shape_cast %54 : vector<1x1x128xf32> to vector<1x128xf32>
    %56 = vector.broadcast %55 : vector<1x128xf32> to vector<24x128xf32>
    %57 = arith.addf %53, %56 : vector<24x128xf32>
    %c2_i32_24 = arith.constant 2 : i32
    %58 = tpu.dynamic_rotate %42 by %c2_i32_24 dim 0 : vector<24x128xf32>, i32 -> vector<24x128xf32>
    %59 = arith.mulf %58, %27 : vector<24x128xf32>
    %60 = arith.truncf %59 : vector<24x128xf32> to vector<24x128xbf16>
    %c1_i32_25 = arith.constant 1 : i32
    %61 = tpu.dynamic_rotate %42 by %c1_i32_25 dim 0 : vector<24x128xf32>, i32 -> vector<24x128xf32>
    %62 = arith.mulf %61, %22 : vector<24x128xf32>
    %63 = arith.truncf %62 : vector<24x128xf32> to vector<24x128xbf16>
    %64 = arith.truncf %42 : vector<24x128xf32> to vector<24x128xbf16>
    %65 = tpu.concatenate %60, %63, %64 in 1 : vector<24x128xbf16>, vector<24x128xbf16>, vector<24x128xbf16> -> vector<24x384xbf16>
    %c0_26 = arith.constant 0 : index
    %c0_27 = arith.constant 0 : index
    %c0_28 = arith.constant 0 : index
    %66 = vector.load %arg6[%c0_26, %c0_27, %c0_28] : memref<2x384x128xbf16, #tpu.memory_space<vmem>>, vector<1x384x128xbf16>
    %67 = vector.shape_cast %66 : vector<1x384x128xbf16> to vector<384x128xbf16>
    %cst_29 = arith.constant dense<0.000000e+00> : vector<24x128xf32>
    %68 = tpu.matmul %65, %67, %cst_29 {dimension_numbers = #tpu.dot_dimension_numbers<[1], [0], [0], [1], [0, 0, 1, 1], [], []>} : vector<24x384xbf16>, vector<384x128xbf16>, vector<24x128xf32> -> vector<24x128xf32>
    %c0_30 = arith.constant 0 : index
    %c0_31 = arith.constant 0 : index
    %c0_32 = arith.constant 0 : index
    %69 = vector.load %arg7[%c0_30, %c0_31, %c0_32] : memref<2x1x128xf32, #tpu.memory_space<vmem>>, vector<1x1x128xf32>
    %70 = vector.shape_cast %69 : vector<1x1x128xf32> to vector<1x128xf32>
    %71 = vector.broadcast %70 : vector<1x128xf32> to vector<24x128xf32>
    %72 = arith.addf %68, %71 : vector<24x128xf32>
    %c2_i32_33 = arith.constant 2 : i32
    %73 = tpu.dynamic_rotate %57 by %c2_i32_33 dim 0 : vector<24x128xf32>, i32 -> vector<24x128xf32>
    %74 = arith.mulf %73, %27 : vector<24x128xf32>
    %75 = arith.truncf %74 : vector<24x128xf32> to vector<24x128xbf16>
    %c1_i32_34 = arith.constant 1 : i32
    %76 = tpu.dynamic_rotate %57 by %c1_i32_34 dim 0 : vector<24x128xf32>, i32 -> vector<24x128xf32>
    %77 = arith.mulf %76, %22 : vector<24x128xf32>
    %78 = arith.truncf %77 : vector<24x128xf32> to vector<24x128xbf16>
    %79 = arith.truncf %57 : vector<24x128xf32> to vector<24x128xbf16>
    %80 = tpu.concatenate %75, %78, %79 in 1 : vector<24x128xbf16>, vector<24x128xbf16>, vector<24x128xbf16> -> vector<24x384xbf16>
    %c1 = arith.constant 1 : index
    %c0_35 = arith.constant 0 : index
    %c0_36 = arith.constant 0 : index
    %81 = vector.load %arg4[%c1, %c0_35, %c0_36] : memref<2x384x128xbf16, #tpu.memory_space<vmem>>, vector<1x384x128xbf16>
    %82 = vector.shape_cast %81 : vector<1x384x128xbf16> to vector<384x128xbf16>
    %cst_37 = arith.constant dense<0.000000e+00> : vector<24x128xf32>
    %83 = tpu.matmul %80, %82, %cst_37 {dimension_numbers = #tpu.dot_dimension_numbers<[1], [0], [0], [1], [0, 0, 1, 1], [], []>} : vector<24x384xbf16>, vector<384x128xbf16>, vector<24x128xf32> -> vector<24x128xf32>
    %c1_38 = arith.constant 1 : index
    %c0_39 = arith.constant 0 : index
    %c0_40 = arith.constant 0 : index
    %84 = vector.load %arg5[%c1_38, %c0_39, %c0_40] : memref<2x1x128xf32, #tpu.memory_space<vmem>>, vector<1x1x128xf32>
    %85 = vector.shape_cast %84 : vector<1x1x128xf32> to vector<1x128xf32>
    %86 = vector.broadcast %85 : vector<1x128xf32> to vector<24x128xf32>
    %87 = arith.addf %83, %86 : vector<24x128xf32>
    %c2_i32_41 = arith.constant 2 : i32
    %88 = tpu.dynamic_rotate %72 by %c2_i32_41 dim 0 : vector<24x128xf32>, i32 -> vector<24x128xf32>
    %89 = arith.mulf %88, %27 : vector<24x128xf32>
    %90 = arith.truncf %89 : vector<24x128xf32> to vector<24x128xbf16>
    %c1_i32_42 = arith.constant 1 : i32
    %91 = tpu.dynamic_rotate %72 by %c1_i32_42 dim 0 : vector<24x128xf32>, i32 -> vector<24x128xf32>
    %92 = arith.mulf %91, %22 : vector<24x128xf32>
    %93 = arith.truncf %92 : vector<24x128xf32> to vector<24x128xbf16>
    %94 = arith.truncf %72 : vector<24x128xf32> to vector<24x128xbf16>
    %95 = tpu.concatenate %90, %93, %94 in 1 : vector<24x128xbf16>, vector<24x128xbf16>, vector<24x128xbf16> -> vector<24x384xbf16>
    %c1_43 = arith.constant 1 : index
    %c0_44 = arith.constant 0 : index
    %c0_45 = arith.constant 0 : index
    %96 = vector.load %arg6[%c1_43, %c0_44, %c0_45] : memref<2x384x128xbf16, #tpu.memory_space<vmem>>, vector<1x384x128xbf16>
    %97 = vector.shape_cast %96 : vector<1x384x128xbf16> to vector<384x128xbf16>
    %cst_46 = arith.constant dense<0.000000e+00> : vector<24x128xf32>
    %98 = tpu.matmul %95, %97, %cst_46 {dimension_numbers = #tpu.dot_dimension_numbers<[1], [0], [0], [1], [0, 0, 1, 1], [], []>} : vector<24x384xbf16>, vector<384x128xbf16>, vector<24x128xf32> -> vector<24x128xf32>
    %c1_47 = arith.constant 1 : index
    %c0_48 = arith.constant 0 : index
    %c0_49 = arith.constant 0 : index
    %99 = vector.load %arg7[%c1_47, %c0_48, %c0_49] : memref<2x1x128xf32, #tpu.memory_space<vmem>>, vector<1x1x128xf32>
    %100 = vector.shape_cast %99 : vector<1x1x128xf32> to vector<1x128xf32>
    %101 = vector.broadcast %100 : vector<1x128xf32> to vector<24x128xf32>
    %102 = arith.addf %98, %101 : vector<24x128xf32>
    %103 = arith.negf %87 : vector<24x128xf32>
    %104 = math.exp %103 : vector<24x128xf32>
    %cst_50 = arith.constant 1.000000e+00 : f32
    %105 = vector.broadcast %cst_50 : f32 to vector<24x128xf32>
    %106 = arith.addf %105, %104 : vector<24x128xf32>
    %107 = arith.divf %105, %106 : vector<24x128xf32>
    %108 = math.tanh %102 : vector<24x128xf32>
    %109 = arith.mulf %107, %108 : vector<24x128xf32>
    %110 = arith.addf %0, %109 : vector<24x128xf32>
    %c0_51 = arith.constant 0 : index
    %c0_52 = arith.constant 0 : index
    %111 = vector.load %arg8[%c0_51, %c0_52] : memref<24x128xf32, #tpu.memory_space<vmem>>, vector<24x128xf32>
    tpu.vector_store %arg8[%c0_51, %c0_52], %110 {strides = array<i32>} : memref<24x128xf32, #tpu.memory_space<vmem>>, vector<24x128xf32>,
    return
  }
  func.func @transform_0(%arg0: i32) -> (i32, i32) {
    %c0_i32 = arith.constant 0 : i32
    %c0_i32_0 = arith.constant 0 : i32
    return %arg0, %c0_i32 : i32, i32
  }
  func.func @transform_1(%arg0: i32) -> (i32, i32) {
    %c0_i32 = arith.constant 0 : i32
    %c0_i32_0 = arith.constant 0 : i32
    %c0_i32_1 = arith.constant 0 : i32
    return %c0_i32, %c0_i32_0 : i32, i32
  }
  func.func @transform_2(%arg0: i32) -> (i32, i32) {
    %c0_i32 = arith.constant 0 : i32
    %c0_i32_0 = arith.constant 0 : i32
    %c0_i32_1 = arith.constant 0 : i32
    return %c0_i32, %c0_i32_0 : i32, i32
  }
  func.func @transform_3(%arg0: i32) -> (i32, i32, i32) {
    %c0_i32 = arith.constant 0 : i32
    %c0_i32_0 = arith.constant 0 : i32
    %c0_i32_1 = arith.constant 0 : i32
    %c0_i32_2 = arith.constant 0 : i32
    return %c0_i32, %c0_i32_0, %c0_i32_1 : i32, i32, i32
  }
  func.func @transform_4(%arg0: i32) -> (i32, i32, i32) {
    %c0_i32 = arith.constant 0 : i32
    %c0_i32_0 = arith.constant 0 : i32
    %c0_i32_1 = arith.constant 0 : i32
    %c0_i32_2 = arith.constant 0 : i32
    return %c0_i32, %c0_i32_0, %c0_i32_1 : i32, i32, i32
  }
  func.func @transform_5(%arg0: i32) -> (i32, i32, i32) {
    %c0_i32 = arith.constant 0 : i32
    %c0_i32_0 = arith.constant 0 : i32
    %c0_i32_1 = arith.constant 0 : i32
    %c0_i32_2 = arith.constant 0 : i32
    return %c0_i32, %c0_i32_0, %c0_i32_1 : i32, i32, i32
  }
  func.func @transform_6(%arg0: i32) -> (i32, i32, i32) {
    %c0_i32 = arith.constant 0 : i32
    %c0_i32_0 = arith.constant 0 : i32
    %c0_i32_1 = arith.constant 0 : i32
    %c0_i32_2 = arith.constant 0 : i32
    return %c0_i32, %c0_i32_0, %c0_i32_1 : i32, i32, i32
  }
  func.func @transform_7(%arg0: i32) -> (i32, i32) {
    %c0_i32 = arith.constant 0 : i32
    %c0_i32_0 = arith.constant 0 : i32
    return %arg0, %c0_i32 : i32, i32
  }
}

</mosaic_0001>

<llo_original>
// kernel: encoder_pallas.1
$region0: #{encoder_pallas.1}
  #allocation0 [shape = 'u32[]', space=smem, size = 0x4, offset = 0x4, fixed_abs, tag = 'smem constant byte address 0x4 - core index']
  #allocation1 [shape = 'u32[144,128]{1,0:T(1,128)}', space=vmem, size = 0x12000, scoped, tag = 'internal scratch']
  %s0 = inlined_call_operand.vmem [shape: f32[96,128], index: 0, kind: input, shape index: {}, may-alias: {0,7}]
  %s1 = inlined_call_operand.vmem [shape: bf16[384,256], index: 1, kind: input, shape index: {}]
  %s2 = inlined_call_operand.vmem [shape: f32[1,256], index: 2, kind: input, shape index: {}]
  %s3 = inlined_call_operand.vmem [shape: bf16[2,384,128], index: 3, kind: input, shape index: {}]
  %s4 = inlined_call_operand.vmem [shape: f32[2,1,128], index: 4, kind: input, shape index: {}]
  %s5 = inlined_call_operand.vmem [shape: bf16[2,384,128], index: 5, kind: input, shape index: {}]
  %s6 = inlined_call_operand.vmem [shape: f32[2,1,128], index: 6, kind: input, shape index: {}]
  %s7 = inlined_call_operand.vmem [shape: f32[96,128], index: 7, kind: output, shape index: {}, may-alias: {0,7}]
  %s8 = sld [smem:[#allocation0]]
  $region61: #{encoder_pallas.1} parent=0
    _
  %s10 = ssub.s32 1, %s8
  %s11 = scalar_select 0, %s10, %s8
  loop: start=0, step=1, limit=6
  $region2: #{encoder_pallas.1} parent=0 // loop_pre_header
    _
  $region3: #{encoder_pallas.1} parent=0 // loop_header
    %s13 = sphi 0, %s17
    %p14 = scmp.ge.s32.totalorder %s13, 6
    %s23 = sphi 0, %s25
    %s26 = sphi 0, %s23
    %s27 = sphi 0, %s26
    %s43 = sphi 0, %s27
    %s47 = sphi 0, %s47
    %s49 = sphi 0, %s47
    %s50 = sphi 0, %s49
    %s64 = sphi 0, %s50
    %s68 = sphi 0, %s68
    %s70 = sphi 0, %s68
    %s71 = sphi 0, %s70
    %s85 = sphi 0, %s71
    %s89 = sphi 0, %s89
    %s91 = sphi 0, %s89
    %s92 = sphi 0, %s91
    %s106 = sphi 0, %s92
    %s110 = sphi 0, %s110
    %s112 = sphi 0, %s110
    %s113 = sphi 0, %s112
    %s127 = sphi 0, %s113
    %s131 = sphi 0, %s131
    %s133 = sphi 0, %s131
    %s134 = sphi 0, %s133
    %s148 = sphi 0, %s134
    %s152 = sphi 0, %s152
    %s154 = sphi 0, %s152
    %s155 = sphi 0, %s154
    %s169 = sphi 0, %s155
    %s175 = sphi 0, %s177
    %s178 = sphi 0, %s175
    %s179 = sphi 0, %s178
    %s195 = sphi 0, %s179
  $region4: #{encoder_pallas.1} parent=0 // loop_header_branch
    %16 = sbr.rel (%p14) target = $region8
  $region5: #{encoder_pallas.1} parent=0 // loop_body
    %s18 = ssub.s32 %s13, 1
    %s19 = ssub.s32 %s13, 2
    %s20 = sadd.s32 %s13, 1
    %s21 = ssub.s32 %s13, %s20
    %p22 = scmp.eq.s32.totalorder %s21, 0
    %s24 = sadd.s32 %s23, 1
    %s25 = scalar_select %p22, %s23, %s24
    %p28 = pneg %p22
    %p29 = scmp.eq.s32.totalorder %s13, 3
    %p30 = por %p28, %p29
    %p31 = scmp.ne.s32.totalorder %s23, %s26
    %p32 = scmp.eq.s32.totalorder %s13, 0
    %p33 = por %p31, %p32
    %p34 = scmp.ne.s32.totalorder %s23, %s26
    %p35 = scmp.eq.s32.totalorder %s18, 3
    %p36 = por %p34, %p35
    %p37 = scmp.ne.s32.totalorder %s26, %s27
    %p38 = scmp.eq.s32.totalorder %s18, 0
    %p39 = por %p37, %p38
    %p40 = scmp.ne.s32.totalorder %s26, %s27
    %p41 = scmp.eq.s32.totalorder %s19, 3
    %p42 = por %p40, %p41
    %p44 = scmp.ne.s32.totalorder %s27, %s43
    %p45 = scmp.eq.s32.totalorder %s19, 0
    %p46 = por %p44, %p45
    %s48 = sadd.s32 %s47, 1
    %p51 = scmp.eq.s32.totalorder %s13, 3
    %p52 = scmp.ne.s32.totalorder %s47, %s49
    %p53 = scmp.eq.s32.totalorder %s13, 0
    %p54 = por %p52, %p53
    %p55 = scmp.ne.s32.totalorder %s47, %s49
    %p56 = scmp.eq.s32.totalorder %s18, 3
    %p57 = por %p55, %p56
    %p58 = scmp.ne.s32.totalorder %s49, %s50
    %p59 = scmp.eq.s32.totalorder %s18, 0
    %p60 = por %p58, %p59
    %p61 = scmp.ne.s32.totalorder %s49, %s50
    %p62 = scmp.eq.s32.totalorder %s19, 3
    %p63 = por %p61, %p62
    %p65 = scmp.ne.s32.totalorder %s50, %s64
    %p66 = scmp.eq.s32.totalorder %s19, 0
    %p67 = por %p65, %p66
    %s69 = sadd.s32 %s68, 1
    %p72 = scmp.eq.s32.totalorder %s13, 3
    %p73 = scmp.ne.s32.totalorder %s68, %s70
    %p74 = scmp.eq.s32.totalorder %s13, 0
    %p75 = por %p73, %p74
    %p76 = scmp.ne.s32.totalorder %s68, %s70
    %p77 = scmp.eq.s32.totalorder %s18, 3
    %p78 = por %p76, %p77
    %p79 = scmp.ne.s32.totalorder %s70, %s71
    %p80 = scmp.eq.s32.totalorder %s18, 0
    %p81 = por %p79, %p80
    %p82 = scmp.ne.s32.totalorder %s70, %s71
    %p83 = scmp.eq.s32.totalorder %s19, 3
    %p84 = por %p82, %p83
    %p86 = scmp.ne.s32.totalorder %s71, %s85
    %p87 = scmp.eq.s32.totalorder %s19, 0
    %p88 = por %p86, %p87
    %s90 = sadd.s32 %s89, 1
    %p93 = scmp.eq.s32.totalorder %s13, 3
    %p94 = scmp.ne.s32.totalorder %s89, %s91
    %p95 = scmp.eq.s32.totalorder %s13, 0
    %p96 = por %p94, %p95
    %p97 = scmp.ne.s32.totalorder %s89, %s91
    %p98 = scmp.eq.s32.totalorder %s18, 3
    %p99 = por %p97, %p98
    %p100 = scmp.ne.s32.totalorder %s91, %s92
    %p101 = scmp.eq.s32.totalorder %s18, 0
    %p102 = por %p100, %p101
    %p103 = scmp.ne.s32.totalorder %s91, %s92
    %p104 = scmp.eq.s32.totalorder %s19, 3
    %p105 = por %p103, %p104
    %p107 = scmp.ne.s32.totalorder %s92, %s106
    %p108 = scmp.eq.s32.totalorder %s19, 0
    %p109 = por %p107, %p108
    %s111 = sadd.s32 %s110, 1
    %p114 = scmp.eq.s32.totalorder %s13, 3
    %p115 = scmp.ne.s32.totalorder %s110, %s112
    %p116 = scmp.eq.s32.totalorder %s13, 0
    %p117 = por %p115, %p116
    %p118 = scmp.ne.s32.totalorder %s110, %s112
    %p119 = scmp.eq.s32.totalorder %s18, 3
    %p120 = por %p118, %p119
    %p121 = scmp.ne.s32.totalorder %s112, %s113
    %p122 = scmp.eq.s32.totalorder %s18, 0
    %p123 = por %p121, %p122
    %p124 = scmp.ne.s32.totalorder %s112, %s113
    %p125 = scmp.eq.s32.totalorder %s19, 3
    %p126 = por %p124, %p125
    %p128 = scmp.ne.s32.totalorder %s113, %s127
    %p129 = scmp.eq.s32.totalorder %s19, 0
    %p130 = por %p128, %p129
    %s132 = sadd.s32 %s131, 1
    %p135 = scmp.eq.s32.totalorder %s13, 3
    %p136 = scmp.ne.s32.totalorder %s131, %s133
    %p137 = scmp.eq.s32.totalorder %s13, 0
    %p138 = por %p136, %p137
    %p139 = scmp.ne.s32.totalorder %s131, %s133
    %p140 = scmp.eq.s32.totalorder %s18, 3
    %p141 = por %p139, %p140
    %p142 = scmp.ne.s32.totalorder %s133, %s134
    %p143 = scmp.eq.s32.totalorder %s18, 0
    %p144 = por %p142, %p143
    %p145 = scmp.ne.s32.totalorder %s133, %s134
    %p146 = scmp.eq.s32.totalorder %s19, 3
    %p147 = por %p145, %p146
    %p149 = scmp.ne.s32.totalorder %s134, %s148
    %p150 = scmp.eq.s32.totalorder %s19, 0
    %p151 = por %p149, %p150
    %s153 = sadd.s32 %s152, 1
    %p156 = scmp.eq.s32.totalorder %s13, 3
    %p157 = scmp.ne.s32.totalorder %s152, %s154
    %p158 = scmp.eq.s32.totalorder %s13, 0
    %p159 = por %p157, %p158
    %p160 = scmp.ne.s32.totalorder %s152, %s154
    %p161 = scmp.eq.s32.totalorder %s18, 3
    %p162 = por %p160, %p161
    %p163 = scmp.ne.s32.totalorder %s154, %s155
    %p164 = scmp.eq.s32.totalorder %s18, 0
    %p165 = por %p163, %p164
    %p166 = scmp.ne.s32.totalorder %s154, %s155
    %p167 = scmp.eq.s32.totalorder %s19, 3
    %p168 = por %p166, %p167
    %p170 = scmp.ne.s32.totalorder %s155, %s169
    %p171 = scmp.eq.s32.totalorder %s19, 0
    %p172 = por %p170, %p171
    %s173 = ssub.s32 %s13, %s20
    %p174 = scmp.eq.s32.totalorder %s173, 0
    %s176 = sadd.s32 %s175, 1
    %s177 = scalar_select %p174, %s175, %s176
    %p180 = pneg %p174
    %p181 = scmp.eq.s32.totalorder %s13, 3
    %p182 = por %p180, %p181
    %p183 = scmp.ne.s32.totalorder %s175, %s178
    %p184 = scmp.eq.s32.totalorder %s13, 0
    %p185 = por %p183, %p184
    %p186 = scmp.ne.s32.totalorder %s175, %s178
    %p187 = scmp.eq.s32.totalorder %s18, 3
    %p188 = por %p186, %p187
    %p189 = scmp.ne.s32.totalorder %s178, %s179
    %p190 = scmp.eq.s32.totalorder %s18, 0
    %p191 = por %p189, %p190
    %p192 = scmp.ne.s32.totalorder %s178, %s179
    %p193 = scmp.eq.s32.totalorder %s19, 3
    %p194 = por %p192, %p193
    %p196 = scmp.ne.s32.totalorder %s179, %s195
    %p197 = scmp.eq.s32.totalorder %s19, 0
    %p198 = por %p196, %p197
    %p199 = scmp.le.s32.totalorder 1, %s13
    %p200 = scmp.lt.s32.totalorder %s13, 5
    %p201 = pnand %p199, %p200
    %p202 = pneg %p201
    // Predicated region
    $region9: #{encoder_pallas.1} parent=5 // pred_check
      _
    $region10: #{encoder_pallas.1} parent=5 // pred_check_branch
      %204 = sbr.rel (%p201) target = $region12
    $region11: #{encoder_pallas.1} parent=5 // pred_region
      %s205 = ssub.s32 %s13, 1
      // Predicated region
      $region13: #{encoder_pallas.1} parent=11 // pred_check
        %p206 = pneg %p60
      $region14: #{encoder_pallas.1} parent=11 // pred_check_branch
        %208 = sbr.rel (%p206) target = $region16
      $region15: #{encoder_pallas.1} parent=11 // pred_region
        _
      $region16: #{encoder_pallas.1} parent=11 // pred_fallthru
        _
      // Predicated region
      $region17: #{encoder_pallas.1} parent=11 // pred_check
        %p209 = pneg %p81
      $region18: #{encoder_pallas.1} parent=11 // pred_check_branch
        %211 = sbr.rel (%p209) target = $region20
      $region19: #{encoder_pallas.1} parent=11 // pred_region
        _
      $region20: #{encoder_pallas.1} parent=11 // pred_fallthru
        _
      // Predicated region
      $region21: #{encoder_pallas.1} parent=11 // pred_check
        %p212 = pneg %p102
      $region22: #{encoder_pallas.1} parent=11 // pred_check_branch
        %214 = sbr.rel (%p212) target = $region24
      $region23: #{encoder_pallas.1} parent=11 // pred_region
        _
      $region24: #{encoder_pallas.1} parent=11 // pred_fallthru
        _
      // Predicated region
      $region25: #{encoder_pallas.1} parent=11 // pred_check
        %p215 = pneg %p123
      $region26: #{encoder_pallas.1} parent=11 // pred_check_branch
        %217 = sbr.rel (%p215) target = $region28
      $region27: #{encoder_pallas.1} parent=11 // pred_region
        _
      $region28: #{encoder_pallas.1} parent=11 // pred_fallthru
        _
      // Predicated region
      $region29: #{encoder_pallas.1} parent=11 // pred_check
        %p218 = pneg %p144
      $region30: #{encoder_pallas.1} parent=11 // pred_check_branch
        %220 = sbr.rel (%p218) target = $region32
      $region31: #{encoder_pallas.1} parent=11 // pred_region
        _
      $region32: #{encoder_pallas.1} parent=11 // pred_fallthru
        _
      // Predicated region
      $region33: #{encoder_pallas.1} parent=11 // pred_check
        %p221 = pneg %p165
      $region34: #{encoder_pallas.1} parent=11 // pred_check_branch
        %223 = sbr.rel (%p221) target = $region36
      $region35: #{encoder_pallas.1} parent=11 // pred_region
        _
      $region36: #{encoder_pallas.1} parent=11 // pred_fallthru
        _
    $region12: #{encoder_pallas.1} parent=5 // pred_fallthru
      _
    %p224 = scmp.lt.s32.totalorder %s13, 4
    // Predicated region
    $region37: #{encoder_pallas.1} parent=5 // pred_check
      %p225 = pneg %p224
    $region38: #{encoder_pallas.1} parent=5 // pred_check_branch
      %227 = sbr.rel (%p225) target = $region40
    $region39: #{encoder_pallas.1} parent=5 // pred_region
      // Predicated region
      $region41: #{encoder_pallas.1} parent=39 // pred_check
        %p228 = pneg %p33
      $region42: #{encoder_pallas.1} parent=39 // pred_check_branch
        %230 = sbr.rel (%p228) target = $region44
      $region43: #{encoder_pallas.1} parent=39 // pred_region
        %s231 = smul.u32 3, %s13
        %p232 = scmp.lt.s32.totalorder %s231, 11
        %s233 = scalar_select %p232, %s231, 11
        %s234 = smul.addr %s233, 8
        %s235 = scalar_lea.vmem %s0, %s234
        %s236 = smul.u32 3, %s13
      $region44: #{encoder_pallas.1} parent=39 // pred_fallthru
        _
    $region40: #{encoder_pallas.1} parent=5 // pred_fallthru
      _
    %p237 = scmp.le.s32.totalorder 1, %s13
    %p238 = scmp.lt.s32.totalorder %s13, 5
    %p239 = pnand %p237, %p238
    %p240 = pneg %p239
    // Predicated region
    $region45: #{encoder_pallas.1} parent=5 // pred_check
      _
    $region46: #{encoder_pallas.1} parent=5 // pred_check_branch
      %242 = sbr.rel (%p239) target = $region48
    $region47: #{encoder_pallas.1} parent=5 // pred_region
      %s243 = ssub.s32 %s13, 1
      %s244 = smul.u32 3, %s18
      %p245 = scmp.lt.s32.totalorder %s244, 11
      %s246 = scalar_select %p245, %s244, 11
      %s247 = smul.addr %s246, 8
      %s248 = scalar_lea.vmem %s0, %s247
      %p249 = pneg %p39
      %p250 = pneg %p36
      %p251 = pneg %p60
      %p252 = pneg %p57
      %p253 = pneg %p81
      %p254 = pneg %p78
      %p255 = pneg %p102
      %p256 = pneg %p99
      %p257 = pneg %p123
      %p258 = pneg %p120
      %p259 = pneg %p144
      %p260 = pneg %p141
      %p261 = pneg %p165
      %p262 = pneg %p162
      %p263 = pneg %p191
      %p264 = pneg %p188
      %s265 = smul.u32 3, %s18
      %p266 = scmp.lt.s32.totalorder %s265, 11
      %s267 = scalar_select %p266, %s265, 11
      %s268 = smul.addr %s267, 8
      %s269 = scalar_lea.vmem %s7, %s268
      %s270 = smul.u32 3, %s18
      %p271 = scmp.lt.s32.totalorder %s270, 11
      %s272 = scalar_select %p271, %s270, 11
      %s273 = smul.addr %s272, 8
      %s274 = scalar_lea.vmem %s0, %s273
      %s275 = smul.u32 3, %s18
      %s276 = smul.u32 3, %s18
      %p277 = scmp.lt.s32.totalorder %s276, 11
      %s278 = scalar_select %p277, %s276, 11
      %s279 = smul.addr %s278, 8
      %s280 = scalar_lea.vmem %s7, %s279
      %s281 = smul.u32 3, %s18
      %v283 = vld [vmem:[%s274] sm:$0xff]
      %v284 = vld [vmem:[%s274 + $0x8] sm:$0xff]
      %v285 = vld [vmem:[%s274 + $0x10] sm:$0xff]
      %v286 = vlaneseq
      %v287 = vshrl.u32 %v286, 7
      %v288 = vadd.s32 %v287, 8
      %v289 = vadd.s32 %v287, 16
      %vm290 = vcmp.lt.s32.totalorder %v287, 0
      %v291 = vsub.s32 0, %v287
      %v292 = vsel %vm290, %v291, %v287
      %v293 = vmul.u32.u64.compose %v292, 2863311531
      %v294 = vextract.low.u32 %v293
      %v295 = vextract.high.u32 %v293
      %v296 = vshrl.u32 %v295, 3
      %v297 = vmul.u32 %v296, 12
      %v298 = vsub.s32 %v292, %v297
      %v299 = vsub.s32 0, %v298
      %v300 = vsel %vm290, %v299, %v298
      %vm301 = vcmp.lt.s32.totalorder %v288, 0
      %v302 = vsub.s32 0, %v288
      %v303 = vsel %vm301, %v302, %v288
      %v304 = vmul.u32.u64.compose %v303, 2863311531
      %v305 = vextract.low.u32 %v304
      %v306 = vextract.high.u32 %v304
      %v307 = vshrl.u32 %v306, 3
      %v308 = vmul.u32 %v307, 12
      %v309 = vsub.s32 %v303, %v308
      %v310 = vsub.s32 0, %v309
      %v311 = vsel %vm301, %v310, %v309
      %vm312 = vcmp.lt.s32.totalorder %v289, 0
      %v313 = vsub.s32 0, %v289
      %v314 = vsel %vm312, %v313, %v289
      %v315 = vmul.u32.u64.compose %v314, 2863311531
      %v316 = vextract.low.u32 %v315
      %v317 = vextract.high.u32 %v315
      %v318 = vshrl.u32 %v317, 3
      %v319 = vmul.u32 %v318, 12
      %v320 = vsub.s32 %v314, %v319
      %v321 = vsub.s32 0, %v320
      %v322 = vsel %vm312, %v321, %v320
      %vm323 = vcmp.ne.s32.totalorder %v300, 0
      %vm324 = vcmp.ne.s32.totalorder %v311, 0
      %vm325 = vcmp.ne.s32.totalorder %v322, 0
      %vm326 = vcmp.lt.s32.totalorder %v300, 0
      %vm327 = vcmp.lt.s32.totalorder %v311, 0
      %vm328 = vcmp.lt.s32.totalorder %v322, 0
      %vm329 = vmand %vm326, %vm323
      %vm330 = vmand %vm327, %vm324
      %vm331 = vmand %vm328, %vm325
      %v332 = vadd.s32 %v300, 12
      %v333 = vadd.s32 %v311, 12
      %v334 = vadd.s32 %v322, 12
      %v335 = vsel %vm329, %v332, %v300
      %v336 = vsel %vm330, %v333, %v311
      %v337 = vsel %vm331, %v334, %v322
      %vm338 = vcmp.ge.s32.totalorder %v335, 1
      %vm339 = vcmp.ge.s32.totalorder %v336, 1
      %vm340 = vcmp.ge.s32.totalorder %v337, 1
      %v341 = vsel %vm338, 1.0, 0.0
      %v342 = vsel %vm339, 1.0, 0.0
      %v343 = vsel %vm340, 1.0, 0.0
      %vm344 = vcmp.ge.s32.totalorder %v335, 2
      %vm345 = vcmp.ge.s32.totalorder %v336, 2
      %vm346 = vcmp.ge.s32.totalorder %v337, 2
      %v347 = vsel %vm344, 1.0, 0.0
      %v348 = vsel %vm345, 1.0, 0.0
      %v349 = vsel %vm346, 1.0, 0.0
      %v350 = vrot.slane %v283, 6
      %v351 = vrot.slane %v284, 6
      %v352 = vrot.slane %v285, 6
      %vm353 = vcmp.lt.s32.totalorder %v287, 2
      %v354 = vsel %vm353, %v351, %v352
      %v355 = vsel %vm353, %v350, %v351
      %v356 = vsel %vm353, %v352, %v350
      %v357 = vmul.f32 %v356, %v347
      %v358 = vmul.f32 %v355, %v348
      %v359 = vmul.f32 %v354, %v349
      %v360 = vpack.c.bf16 %v358, %v357
      %v361 = vpack.c.bf16 %v359, %v359
      %v362 = vrot.slane %v283, 7
      %v363 = vrot.slane %v284, 7
      %v364 = vrot.slane %v285, 7
      %vm365 = vcmp.lt.s32.totalorder %v287, 1
      %v366 = vsel %vm365, %v363, %v364
      %v367 = vsel %vm365, %v362, %v363
      %v368 = vsel %vm365, %v364, %v362
      %v369 = vmul.f32 %v368, %v341
      %v370 = vmul.f32 %v367, %v342
      %v371 = vmul.f32 %v366, %v343
      %v372 = vpack.c.bf16 %v370, %v369
      %v373 = vpack.c.bf16 %v371, %v371
      %v374 = vpack.c.bf16 %v284, %v283
      %v375 = vpack.c.bf16 %v285, %v285
      %v376 = vld [vmem:[%s1] sm:$0xff]
      %v377 = vld [vmem:[%s1 + $0x8] sm:$0xff]
      %v378 = vld [vmem:[%s1 + $0x10] sm:$0xff]
      %v379 = vld [vmem:[%s1 + $0x18] sm:$0xff]
      %v380 = vld [vmem:[%s1 + $0x20] sm:$0xff]
      %v381 = vld [vmem:[%s1 + $0x28] sm:$0xff]
      %v382 = vld [vmem:[%s1 + $0x30] sm:$0xff]
      %v383 = vld [vmem:[%s1 + $0x38] sm:$0xff]
      %v384 = vld [vmem:[%s1 + $0x40] sm:$0xff]
      %v385 = vld [vmem:[%s1 + $0x48] sm:$0xff]
      %v386 = vld [vmem:[%s1 + $0x50] sm:$0xff]
      %v387 = vld [vmem:[%s1 + $0x58] sm:$0xff]
      %v388 = vld [vmem:[%s1 + $0x60] sm:$0xff]
      %v389 = vld [vmem:[%s1 + $0x68] sm:$0xff]
      %v390 = vld [vmem:[%s1 + $0x70] sm:$0xff]
      %v391 = vld [vmem:[%s1 + $0x78] sm:$0xff]
      %v392 = vld [vmem:[%s1 + $0x80] sm:$0xff]
      %v393 = vld [vmem:[%s1 + $0x88] sm:$0xff]
      %v394 = vld [vmem:[%s1 + $0x90] sm:$0xff]
      %v395 = vld [vmem:[%s1 + $0x98] sm:$0xff]
      %v396 = vld [vmem:[%s1 + $0xa0] sm:$0xff]
      %v397 = vld [vmem:[%s1 + $0xa8] sm:$0xff]
      %v398 = vld [vmem:[%s1 + $0xb0] sm:$0xff]
      %v399 = vld [vmem:[%s1 + $0xb8] sm:$0xff]
      %v400 = vld [vmem:[%s1 + $0xc0] sm:$0xff]
      %v401 = vld [vmem:[%s1 + $0xc8] sm:$0xff]
      %v402 = vld [vmem:[%s1 + $0xd0] sm:$0xff]
      %v403 = vld [vmem:[%s1 + $0xd8] sm:$0xff]
      %v404 = vld [vmem:[%s1 + $0xe0] sm:$0xff]
      %v405 = vld [vmem:[%s1 + $0xe8] sm:$0xff]
      %v406 = vld [vmem:[%s1 + $0xf0] sm:$0xff]
      %v407 = vld [vmem:[%s1 + $0xf8] sm:$0xff]
      %v408 = vld [vmem:[%s1 + $0x100] sm:$0xff]
      %v409 = vld [vmem:[%s1 + $0x108] sm:$0xff]
      %v410 = vld [vmem:[%s1 + $0x110] sm:$0xff]
      %v411 = vld [vmem:[%s1 + $0x118] sm:$0xff]
      %v412 = vld [vmem:[%s1 + $0x120] sm:$0xff]
      %v413 = vld [vmem:[%s1 + $0x128] sm:$0xff]
      %v414 = vld [vmem:[%s1 + $0x130] sm:$0xff]
      %v415 = vld [vmem:[%s1 + $0x138] sm:$0xff]
      %v416 = vld [vmem:[%s1 + $0x140] sm:$0xff]
      %v417 = vld [vmem:[%s1 + $0x148] sm:$0xff]
      %v418 = vld [vmem:[%s1 + $0x150] sm:$0xff]
      %v419 = vld [vmem:[%s1 + $0x158] sm:$0xff]
      %v420 = vld [vmem:[%s1 + $0x160] sm:$0xff]
      %v421 = vld [vmem:[%s1 + $0x168] sm:$0xff]
      %v422 = vld [vmem:[%s1 + $0x170] sm:$0xff]
      %v423 = vld [vmem:[%s1 + $0x178] sm:$0xff]
      %v424 = vld [vmem:[%s2] sm:$0x3]
      %v426 = vlaneseq
      %v427 = vshrl.u32 %v426, 7
      %v428 = vsub.s32 0, %v427
      %v429 = vrot.slane %v424, %v428
      %v430 = vlaneseq
      %v431 = vshrl.u32 %v430, 7
      %v432 = vsub.s32 1, %v431
      %v433 = vrot.slane %v424, %v432
      %v484 = vunpack.c.l.b16 %v376
      %v485 = vunpack.c.h.b16 %v376
      %v486 = vunpack.c.l.b16 %v377
      %v487 = vunpack.c.h.b16 %v377
      %v488 = vunpack.c.l.b16 %v378
      %v489 = vunpack.c.h.b16 %v378
      %v490 = vunpack.c.l.b16 %v379
      %v491 = vunpack.c.h.b16 %v379
      %v492 = vunpack.c.l.b16 %v380
      %v493 = vunpack.c.h.b16 %v380
      %v494 = vunpack.c.l.b16 %v381
      %v495 = vunpack.c.h.b16 %v381
      %v496 = vunpack.c.l.b16 %v382
      %v497 = vunpack.c.h.b16 %v382
      %v498 = vunpack.c.l.b16 %v383
      %v499 = vunpack.c.h.b16 %v383
      %v500 = vunpack.c.l.b16 %v384
      %v501 = vunpack.c.h.b16 %v384
      %v502 = vunpack.c.l.b16 %v385
      %v503 = vunpack.c.h.b16 %v385
      %v504 = vunpack.c.l.b16 %v386
      %v505 = vunpack.c.h.b16 %v386
      %v506 = vunpack.c.l.b16 %v387
      %v507 = vunpack.c.h.b16 %v387
      %v508 = vunpack.c.l.b16 %v388
      %v509 = vunpack.c.h.b16 %v388
      %v510 = vunpack.c.l.b16 %v389
      %v511 = vunpack.c.h.b16 %v389
      %v512 = vunpack.c.l.b16 %v390
      %v513 = vunpack.c.h.b16 %v390
      %v514 = vunpack.c.l.b16 %v391
      %v515 = vunpack.c.h.b16 %v391
      %v516 = vunpack.c.l.b16 %v392
      %v517 = vunpack.c.h.b16 %v392
      %v518 = vunpack.c.l.b16 %v393
      %v519 = vunpack.c.h.b16 %v393
      %v520 = vunpack.c.l.b16 %v394
      %v521 = vunpack.c.h.b16 %v394
      %v522 = vunpack.c.l.b16 %v395
      %v523 = vunpack.c.h.b16 %v395
      %v524 = vunpack.c.l.b16 %v396
      %v525 = vunpack.c.h.b16 %v396
      %v526 = vunpack.c.l.b16 %v397
      %v527 = vunpack.c.h.b16 %v397
      %v528 = vunpack.c.l.b16 %v398
      %v529 = vunpack.c.h.b16 %v398
      %v530 = vunpack.c.l.b16 %v399
      %v531 = vunpack.c.h.b16 %v399
      %v532 = vunpack.c.l.b16 %v400
      %v533 = vunpack.c.h.b16 %v400
      %v534 = vunpack.c.l.b16 %v401
      %v535 = vunpack.c.h.b16 %v401
      %v536 = vunpack.c.l.b16 %v402
      %v537 = vunpack.c.h.b16 %v402
      %v538 = vunpack.c.l.b16 %v403
      %v539 = vunpack.c.h.b16 %v403
      %v540 = vunpack.c.l.b16 %v404
      %v541 = vunpack.c.h.b16 %v404
      %v542 = vunpack.c.l.b16 %v405
      %v543 = vunpack.c.h.b16 %v405
      %v544 = vunpack.c.l.b16 %v406
      %v545 = vunpack.c.h.b16 %v406
      %v546 = vunpack.c.l.b16 %v407
      %v547 = vunpack.c.h.b16 %v407
      %v548 = vunpack.c.l.b16 %v408
      %v549 = vunpack.c.h.b16 %v408
      %v550 = vunpack.c.l.b16 %v409
      %v551 = vunpack.c.h.b16 %v409
      %v552 = vunpack.c.l.b16 %v410
      %v553 = vunpack.c.h.b16 %v410
      %v554 = vunpack.c.l.b16 %v411
      %v555 = vunpack.c.h.b16 %v411
      %v556 = vunpack.c.l.b16 %v412
      %v557 = vunpack.c.h.b16 %v412
      %v558 = vunpack.c.l.b16 %v413
      %v559 = vunpack.c.h.b16 %v413
      %v560 = vunpack.c.l.b16 %v414
      %v561 = vunpack.c.h.b16 %v414
      %v562 = vunpack.c.l.b16 %v415
      %v563 = vunpack.c.h.b16 %v415
      %v564 = vunpack.c.l.b16 %v416
      %v565 = vunpack.c.h.b16 %v416
      %v566 = vunpack.c.l.b16 %v417
      %v567 = vunpack.c.h.b16 %v417
      %v568 = vunpack.c.l.b16 %v418
      %v569 = vunpack.c.h.b16 %v418
      %v570 = vunpack.c.l.b16 %v419
      %v571 = vunpack.c.h.b16 %v419
      %v572 = vunpack.c.l.b16 %v420
      %v573 = vunpack.c.h.b16 %v420
      %v574 = vunpack.c.l.b16 %v421
      %v575 = vunpack.c.h.b16 %v421
      %v576 = vunpack.c.l.b16 %v422
      %v577 = vunpack.c.h.b16 %v422
      %v578 = vunpack.c.l.b16 %v423
      %v579 = vunpack.c.h.b16 %v423
      %v580 = vpack.c.b16 %v486, %v484
      %v581 = vpack.c.b16 %v487, %v485
      %v582 = vpack.c.b16 %v490, %v488
      %v583 = vpack.c.b16 %v491, %v489
      %v584 = vpack.c.b16 %v494, %v492
      %v585 = vpack.c.b16 %v495, %v493
      %v586 = vpack.c.b16 %v498, %v496
      %v587 = vpack.c.b16 %v499, %v497
      %v588 = vpack.c.b16 %v502, %v500
      %v589 = vpack.c.b16 %v503, %v501
      %v590 = vpack.c.b16 %v506, %v504
      %v591 = vpack.c.b16 %v507, %v505
      %v592 = vpack.c.b16 %v510, %v508
      %v593 = vpack.c.b16 %v511, %v509
      %v594 = vpack.c.b16 %v514, %v512
      %v595 = vpack.c.b16 %v515, %v513
      %v596 = vpack.c.b16 %v518, %v516
      %v597 = vpack.c.b16 %v519, %v517
      %v598 = vpack.c.b16 %v522, %v520
      %v599 = vpack.c.b16 %v523, %v521
      %v600 = vpack.c.b16 %v526, %v524
      %v601 = vpack.c.b16 %v527, %v525
      %v602 = vpack.c.b16 %v530, %v528
      %v603 = vpack.c.b16 %v531, %v529
      %v604 = vpack.c.b16 %v534, %v532
      %v605 = vpack.c.b16 %v535, %v533
      %v606 = vpack.c.b16 %v538, %v536
      %v607 = vpack.c.b16 %v539, %v537
      %v608 = vpack.c.b16 %v542, %v540
      %v609 = vpack.c.b16 %v543, %v541
      %v610 = vpack.c.b16 %v546, %v544
      %v611 = vpack.c.b16 %v547, %v545
      %v612 = vpack.c.b16 %v550, %v548
      %v613 = vpack.c.b16 %v551, %v549
      %v614 = vpack.c.b16 %v554, %v552
      %v615 = vpack.c.b16 %v555, %v553
      %v616 = vpack.c.b16 %v558, %v556
      %v617 = vpack.c.b16 %v559, %v557
      %v618 = vpack.c.b16 %v562, %v560
      %v619 = vpack.c.b16 %v563, %v561
      %v620 = vpack.c.b16 %v566, %v564
      %v621 = vpack.c.b16 %v567, %v565
      %v622 = vpack.c.b16 %v570, %v568
      %v623 = vpack.c.b16 %v571, %v569
      %v624 = vpack.c.b16 %v574, %v572
      %v625 = vpack.c.b16 %v575, %v573
      %v626 = vpack.c.b16 %v578, %v576
      %v627 = vpack.c.b16 %v579, %v577
      %676 = vmatprep.subr.bf16.mxu0 %v581
      %677 = vmatpush1.bf16.msra.mxu0 %v580
      %678 = vmatprep.subr.bf16.mxu0 %v583
      %679 = vmatpush1.bf16.msra.mxu0 %v582
      %680 = vmatprep.subr.bf16.mxu0 %v585
      %681 = vmatpush1.bf16.msra.mxu0 %v584
      %682 = vmatprep.subr.bf16.mxu0 %v587
      %683 = vmatpush1.bf16.msra.mxu0 %v586
      %684 = vmatprep.subr.bf16.mxu0 %v589
      %685 = vmatpush1.bf16.msra.mxu0 %v588
      %686 = vmatprep.subr.bf16.mxu0 %v591
      %687 = vmatpush1.bf16.msra.mxu0 %v590
      %688 = vmatprep.subr.bf16.mxu0 %v593
      %689 = vmatpush1.bf16.msra.mxu0 %v592
      %690 = vmatprep.subr.bf16.mxu0 %v595
      %691 = vmatpush1.bf16.msra.mxu0 %v594
      %692 = vmatprep.subr.bf16.mxu0 %v597
      %693 = vmatpush1.bf16.msra.mxu0 %v596
      %694 = vmatprep.subr.bf16.mxu0 %v599
      %695 = vmatpush1.bf16.msra.mxu0 %v598
      %696 = vmatprep.subr.bf16.mxu0 %v601
      %697 = vmatpush1.bf16.msra.mxu0 %v600
      %698 = vmatprep.subr.bf16.mxu0 %v603
      %699 = vmatpush1.bf16.msra.mxu0 %v602
      %700 = vmatprep.subr.bf16.mxu0 %v605
      %701 = vmatpush1.bf16.msra.mxu0 %v604
      %702 = vmatprep.subr.bf16.mxu0 %v607
      %703 = vmatpush1.bf16.msra.mxu0 %v606
      %704 = vmatprep.subr.bf16.mxu0 %v609
      %705 = vmatpush1.bf16.msra.mxu0 %v608
      %706 = vmatprep.subr.bf16.mxu0 %v611
      %707 = vmatpush1.bf16.msra.mxu0 %v610
      %708 = vmatprep.mubr.bf16.mxu0 %v372
      %709 = vmatmul.mubr.bf16.gmra.mrb[0].mxu0 %v360
      %v710 = vpop.f32.mrb[0].mxu0
      %v711 = vadd.f32 %v429, %v710
      %v712 = vpop.f32.mrb[0].mxu0
      %v713 = vadd.f32 %v433, %v712
      %v714 = vpop.f32.mrb[0].mxu0
      %v715 = vadd.f32 %v429, %v714
      %v716 = vpop.f32.mrb[0].mxu0
      %v717 = vadd.f32 %v433, %v716
      %718 = vmatprep.mubr.bf16.mxu0 %v373
      %719 = vmatmul.mubr.bf16.gmra.mrb[0].mxu0 %v361
      %v720 = vpop.f32.mrb[0].mxu0
      %v721 = vadd.f32 %v429, %v720
      %v722 = vpop.f32.mrb[0].mxu0
      %v723 = vadd.f32 %v433, %v722
      %v724 = vpop.f32.mrb[0].mxu0
      %v725 = vpop.f32.mrb[0].mxu0
      %726 = vdwg.mxu0
      %727 = vmatprep.subr.bf16.mxu0 %v613
      %728 = vmatpush1.bf16.msra.mxu0 %v612
      %729 = vmatprep.subr.bf16.mxu0 %v615
      %730 = vmatpush1.bf16.msra.mxu0 %v614
      %731 = vmatprep.subr.bf16.mxu0 %v617
      %732 = vmatpush1.bf16.msra.mxu0 %v616
      %733 = vmatprep.subr.bf16.mxu0 %v619
      %734 = vmatpush1.bf16.msra.mxu0 %v618
      %735 = vmatprep.subr.bf16.mxu0 %v621
      %736 = vmatpush1.bf16.msra.mxu0 %v620
      %737 = vmatprep.subr.bf16.mxu0 %v623
      %738 = vmatpush1.bf16.msra.mxu0 %v622
      %739 = vmatprep.subr.bf16.mxu0 %v625
      %740 = vmatpush1.bf16.msra.mxu0 %v624
      %741 = vmatprep.subr.bf16.mxu0 %v627
      %742 = vmatpush1.bf16.msra.mxu0 %v626
      %743 = vmatprep.subr.bf16.mxu0 0
      %744 = vmatpush1.bf16.msra.mxu0 0
      %745 = vmatprep.subr.bf16.mxu0 0
      %746 = vmatpush1.bf16.msra.mxu0 0
      %747 = vmatprep.subr.bf16.mxu0 0
      %748 = vmatpush1.bf16.msra.mxu0 0
      %749 = vmatprep.subr.bf16.mxu0 0
      %750 = vmatpush1.bf16.msra.mxu0 0
      %751 = vmatprep.subr.bf16.mxu0 0
      %752 = vmatpush1.bf16.msra.mxu0 0
      %753 = vmatprep.subr.bf16.mxu0 0
      %754 = vmatpush1.bf16.msra.mxu0 0
      %755 = vmatprep.subr.bf16.mxu0 0
      %756 = vmatpush1.bf16.msra.mxu0 0
      %757 = vmatprep.subr.bf16.mxu0 0
      %758 = vmatpush1.bf16.msra.mxu0 0
      %759 = vmatprep.mubr.bf16.mxu0 0
      %760 = vmatmul.mubr.bf16.gmra.mrb[0].mxu0 %v374
      %v761 = vpop.f32.mrb[0].mxu0
      %v762 = vadd.f32 %v711, %v761
      %v763 = vpop.f32.mrb[0].mxu0
      %v764 = vadd.f32 %v713, %v763
      %v765 = vpop.f32.mrb[0].mxu0
      %v766 = vadd.f32 %v715, %v765
      %v767 = vpop.f32.mrb[0].mxu0
      %v768 = vadd.f32 %v717, %v767
      %769 = vmatprep.mubr.bf16.mxu0 0
      %770 = vmatmul.mubr.bf16.gmra.mrb[0].mxu0 %v375
      %v771 = vpop.f32.mrb[0].mxu0
      %v772 = vadd.f32 %v721, %v771
      %v773 = vpop.f32.mrb[0].mxu0
      %v774 = vadd.f32 %v723, %v773
      %v775 = vpop.f32.mrb[0].mxu0
      %v776 = vpop.f32.mrb[0].mxu0
      %777 = vdwg.mxu0
      %v778 = vrot.slane %v762, 6
      %v779 = vrot.slane %v766, 6
      %v780 = vrot.slane %v772, 6
      %v781 = vsel %vm353, %v779, %v780
      %v782 = vsel %vm353, %v778, %v779
      %v783 = vsel %vm353, %v780, %v778
      %v784 = vmul.f32 %v783, %v347
      %v785 = vmul.f32 %v782, %v348
      %v786 = vmul.f32 %v781, %v349
      %v787 = vpack.c.bf16 %v785, %v784
      %v788 = vpack.c.bf16 %v786, %v786
      %v789 = vrot.slane %v762, 7
      %v790 = vrot.slane %v766, 7
      %v791 = vrot.slane %v772, 7
      %v792 = vsel %vm365, %v790, %v791
      %v793 = vsel %vm365, %v789, %v790
      %v794 = vsel %vm365, %v791, %v789
      %v795 = vmul.f32 %v794, %v341
      %v796 = vmul.f32 %v793, %v342
      %v797 = vmul.f32 %v792, %v343
      %v798 = vpack.c.bf16 %v796, %v795
      %v799 = vpack.c.bf16 %v797, %v797
      %v800 = vpack.c.bf16 %v766, %v762
      %v801 = vpack.c.bf16 %v772, %v772
      %v802 = vld [vmem:[%s3] sm:$0xf]
      %v803 = vld [vmem:[%s3 + $0x4] sm:$0xf]
      %v804 = vld [vmem:[%s3 + $0x8] sm:$0xf]
      %v805 = vld [vmem:[%s3 + $0xc] sm:$0xf]
      %v806 = vld [vmem:[%s3 + $0x10] sm:$0xf]
      %v807 = vld [vmem:[%s3 + $0x14] sm:$0xf]
      %v808 = vld [vmem:[%s3 + $0x18] sm:$0xf]
      %v809 = vld [vmem:[%s3 + $0x1c] sm:$0xf]
      %v810 = vld [vmem:[%s3 + $0x20] sm:$0xf]
      %v811 = vld [vmem:[%s3 + $0x24] sm:$0xf]
      %v812 = vld [vmem:[%s3 + $0x28] sm:$0xf]
      %v813 = vld [vmem:[%s3 + $0x2c] sm:$0xf]
      %v814 = vld [vmem:[%s3 + $0x30] sm:$0xf]
      %v815 = vld [vmem:[%s3 + $0x34] sm:$0xf]
      %v816 = vld [vmem:[%s3 + $0x38] sm:$0xf]
      %v817 = vld [vmem:[%s3 + $0x3c] sm:$0xf]
      %v818 = vld [vmem:[%s3 + $0x40] sm:$0xf]
      %v819 = vld [vmem:[%s3 + $0x44] sm:$0xf]
      %v820 = vld [vmem:[%s3 + $0x48] sm:$0xf]
      %v821 = vld [vmem:[%s3 + $0x4c] sm:$0xf]
      %v822 = vld [vmem:[%s3 + $0x50] sm:$0xf]
      %v823 = vld [vmem:[%s3 + $0x54] sm:$0xf]
      %v824 = vld [vmem:[%s3 + $0x58] sm:$0xf]
      %v825 = vld [vmem:[%s3 + $0x5c] sm:$0xf]
      %v826 = vld [vmem:[%s3 + $0x60] sm:$0xf]
      %v827 = vld [vmem:[%s3 + $0x64] sm:$0xf]
      %v828 = vld [vmem:[%s3 + $0x68] sm:$0xf]
      %v829 = vld [vmem:[%s3 + $0x6c] sm:$0xf]
      %v830 = vld [vmem:[%s3 + $0x70] sm:$0xf]
      %v831 = vld [vmem:[%s3 + $0x74] sm:$0xf]
      %v832 = vld [vmem:[%s3 + $0x78] sm:$0xf]
      %v833 = vld [vmem:[%s3 + $0x7c] sm:$0xf]
      %v834 = vld [vmem:[%s3 + $0x80] sm:$0xf]
      %v835 = vld [vmem:[%s3 + $0x84] sm:$0xf]
      %v836 = vld [vmem:[%s3 + $0x88] sm:$0xf]
      %v837 = vld [vmem:[%s3 + $0x8c] sm:$0xf]
      %v838 = vld [vmem:[%s3 + $0x90] sm:$0xf]
      %v839 = vld [vmem:[%s3 + $0x94] sm:$0xf]
      %v840 = vld [vmem:[%s3 + $0x98] sm:$0xf]
      %v841 = vld [vmem:[%s3 + $0x9c] sm:$0xf]
      %v842 = vld [vmem:[%s3 + $0xa0] sm:$0xf]
      %v843 = vld [vmem:[%s3 + $0xa4] sm:$0xf]
      %v844 = vld [vmem:[%s3 + $0xa8] sm:$0xf]
      %v845 = vld [vmem:[%s3 + $0xac] sm:$0xf]
      %v846 = vld [vmem:[%s3 + $0xb0] sm:$0xf]
      %v847 = vld [vmem:[%s3 + $0xb4] sm:$0xf]
      %v848 = vld [vmem:[%s3 + $0xb8] sm:$0xf]
      %v849 = vld [vmem:[%s3 + $0xbc] sm:$0xf]
      %v850 = vld [vmem:[%s4] sm:$0x1]
      %v852 = vlaneseq
      %v853 = vshrl.u32 %v852, 7
      %v854 = vsub.s32 0, %v853
      %v855 = vrot.slane %v850, %v854
      %v905 = vunpack.c.l.b16 %v802
      %v906 = vunpack.c.l.b16 %v803
      %v907 = vunpack.c.l.b16 %v804
      %v908 = vunpack.c.l.b16 %v805
      %v909 = vunpack.c.l.b16 %v806
      %v910 = vunpack.c.l.b16 %v807
      %v911 = vunpack.c.l.b16 %v808
      %v912 = vunpack.c.l.b16 %v809
      %v913 = vunpack.c.l.b16 %v810
      %v914 = vunpack.c.l.b16 %v811
      %v915 = vunpack.c.l.b16 %v812
      %v916 = vunpack.c.l.b16 %v813
      %v917 = vunpack.c.l.b16 %v814
      %v918 = vunpack.c.l.b16 %v815
      %v919 = vunpack.c.l.b16 %v816
      %v920 = vunpack.c.l.b16 %v817
      %v921 = vunpack.c.l.b16 %v818
      %v922 = vunpack.c.l.b16 %v819
      %v923 = vunpack.c.l.b16 %v820
      %v924 = vunpack.c.l.b16 %v821
      %v925 = vunpack.c.l.b16 %v822
      %v926 = vunpack.c.l.b16 %v823
      %v927 = vunpack.c.l.b16 %v824
      %v928 = vunpack.c.l.b16 %v825
      %v929 = vunpack.c.l.b16 %v826
      %v930 = vunpack.c.l.b16 %v827
      %v931 = vunpack.c.l.b16 %v828
      %v932 = vunpack.c.l.b16 %v829
      %v933 = vunpack.c.l.b16 %v830
      %v934 = vunpack.c.l.b16 %v831
      %v935 = vunpack.c.l.b16 %v832
      %v936 = vunpack.c.l.b16 %v833
      %v937 = vunpack.c.l.b16 %v834
      %v938 = vunpack.c.l.b16 %v835
      %v939 = vunpack.c.l.b16 %v836
      %v940 = vunpack.c.l.b16 %v837
      %v941 = vunpack.c.l.b16 %v838
      %v942 = vunpack.c.l.b16 %v839
      %v943 = vunpack.c.l.b16 %v840
      %v944 = vunpack.c.l.b16 %v841
      %v945 = vunpack.c.l.b16 %v842
      %v946 = vunpack.c.l.b16 %v843
      %v947 = vunpack.c.l.b16 %v844
      %v948 = vunpack.c.l.b16 %v845
      %v949 = vunpack.c.l.b16 %v846
      %v950 = vunpack.c.l.b16 %v847
      %v951 = vunpack.c.l.b16 %v848
      %v952 = vunpack.c.l.b16 %v849
      %v953 = vpack.c.b16 %v906, %v905
      %v954 = vpack.c.b16 %v908, %v907
      %v955 = vpack.c.b16 %v910, %v909
      %v956 = vpack.c.b16 %v912, %v911
      %v957 = vpack.c.b16 %v914, %v913
      %v958 = vpack.c.b16 %v916, %v915
      %v959 = vpack.c.b16 %v918, %v917
      %v960 = vpack.c.b16 %v920, %v919
      %v961 = vpack.c.b16 %v922, %v921
      %v962 = vpack.c.b16 %v924, %v923
      %v963 = vpack.c.b16 %v926, %v925
      %v964 = vpack.c.b16 %v928, %v927
      %v965 = vpack.c.b16 %v930, %v929
      %v966 = vpack.c.b16 %v932, %v931
      %v967 = vpack.c.b16 %v934, %v933
      %v968 = vpack.c.b16 %v936, %v935
      %v969 = vpack.c.b16 %v938, %v937
      %v970 = vpack.c.b16 %v940, %v939
      %v971 = vpack.c.b16 %v942, %v941
      %v972 = vpack.c.b16 %v944, %v943
      %v973 = vpack.c.b16 %v946, %v945
      %v974 = vpack.c.b16 %v948, %v947
      %v975 = vpack.c.b16 %v950, %v949
      %v976 = vpack.c.b16 %v952, %v951
      %1001 = vmatprep.subr.bf16.mxu0 0
      %1002 = vmatpush1.bf16.msra.mxu0 %v953
      %1003 = vmatprep.subr.bf16.mxu0 0
      %1004 = vmatpush1.bf16.msra.mxu0 %v954
      %1005 = vmatprep.subr.bf16.mxu0 0
      %1006 = vmatpush1.bf16.msra.mxu0 %v955
      %1007 = vmatprep.subr.bf16.mxu0 0
      %1008 = vmatpush1.bf16.msra.mxu0 %v956
      %1009 = vmatprep.subr.bf16.mxu0 0
      %1010 = vmatpush1.bf16.msra.mxu0 %v957
      %1011 = vmatprep.subr.bf16.mxu0 0
      %1012 = vmatpush1.bf16.msra.mxu0 %v958
      %1013 = vmatprep.subr.bf16.mxu0 0
      %1014 = vmatpush1.bf16.msra.mxu0 %v959
      %1015 = vmatprep.subr.bf16.mxu0 0
      %1016 = vmatpush1.bf16.msra.mxu0 %v960
      %1017 = vmatprep.subr.bf16.mxu0 0
      %1018 = vmatpush1.bf16.msra.mxu0 %v961
      %1019 = vmatprep.subr.bf16.mxu0 0
      %1020 = vmatpush1.bf16.msra.mxu0 %v962
      %1021 = vmatprep.subr.bf16.mxu0 0
      %1022 = vmatpush1.bf16.msra.mxu0 %v963
      %1023 = vmatprep.subr.bf16.mxu0 0
      %1024 = vmatpush1.bf16.msra.mxu0 %v964
      %1025 = vmatprep.subr.bf16.mxu0 0
      %1026 = vmatpush1.bf16.msra.mxu0 %v965
      %1027 = vmatprep.subr.bf16.mxu0 0
      %1028 = vmatpush1.bf16.msra.mxu0 %v966
      %1029 = vmatprep.subr.bf16.mxu0 0
      %1030 = vmatpush1.bf16.msra.mxu0 %v967
      %1031 = vmatprep.subr.bf16.mxu0 0
      %1032 = vmatpush1.bf16.msra.mxu0 %v968
      %1033 = vmatprep.mubr.bf16.mxu0 %v798
      %1034 = vmatmul.mubr.bf16.gmra.mrb[0].mxu0 %v787
      %v1035 = vpop.f32.mrb[0].mxu0
      %v1036 = vadd.f32 %v855, %v1035
      %v1037 = vpop.f32.mrb[0].mxu0
      %v1038 = vpop.f32.mrb[0].mxu0
      %v1039 = vadd.f32 %v855, %v1038
      %v1040 = vpop.f32.mrb[0].mxu0
      %1041 = vmatprep.mubr.bf16.mxu0 %v799
      %1042 = vmatmul.mubr.bf16.gmra.mrb[0].mxu0 %v788
      %v1043 = vpop.f32.mrb[0].mxu0
      %v1044 = vadd.f32 %v855, %v1043
      %v1045 = vpop.f32.mrb[0].mxu0
      %v1046 = vpop.f32.mrb[0].mxu0
      %v1047 = vpop.f32.mrb[0].mxu0
      %1048 = vdwg.mxu0
      %1049 = vmatprep.subr.bf16.mxu0 0
      %1050 = vmatpush1.bf16.msra.mxu0 %v969
      %1051 = vmatprep.subr.bf16.mxu0 0
      %1052 = vmatpush1.bf16.msra.mxu0 %v970
      %1053 = vmatprep.subr.bf16.mxu0 0
      %1054 = vmatpush1.bf16.msra.mxu0 %v971
      %1055 = vmatprep.subr.bf16.mxu0 0
      %1056 = vmatpush1.bf16.msra.mxu0 %v972
      %1057 = vmatprep.subr.bf16.mxu0 0
      %1058 = vmatpush1.bf16.msra.mxu0 %v973
      %1059 = vmatprep.subr.bf16.mxu0 0
      %1060 = vmatpush1.bf16.msra.mxu0 %v974
      %1061 = vmatprep.subr.bf16.mxu0 0
      %1062 = vmatpush1.bf16.msra.mxu0 %v975
      %1063 = vmatprep.subr.bf16.mxu0 0
      %1064 = vmatpush1.bf16.msra.mxu0 %v976
      %1065 = vmatprep.subr.bf16.mxu0 0
      %1066 = vmatpush1.bf16.msra.mxu0 0
      %1067 = vmatprep.subr.bf16.mxu0 0
      %1068 = vmatpush1.bf16.msra.mxu0 0
      %1069 = vmatprep.subr.bf16.mxu0 0
      %1070 = vmatpush1.bf16.msra.mxu0 0
      %1071 = vmatprep.subr.bf16.mxu0 0
      %1072 = vmatpush1.bf16.msra.mxu0 0
      %1073 = vmatprep.subr.bf16.mxu0 0
      %1074 = vmatpush1.bf16.msra.mxu0 0
      %1075 = vmatprep.subr.bf16.mxu0 0
      %1076 = vmatpush1.bf16.msra.mxu0 0
      %1077 = vmatprep.subr.bf16.mxu0 0
      %1078 = vmatpush1.bf16.msra.mxu0 0
      %1079 = vmatprep.subr.bf16.mxu0 0
      %1080 = vmatpush1.bf16.msra.mxu0 0
      %1081 = vmatprep.mubr.bf16.mxu0 0
      %1082 = vmatmul.mubr.bf16.gmra.mrb[0].mxu0 %v800
      %v1083 = vpop.f32.mrb[0].mxu0
      %v1084 = vadd.f32 %v1036, %v1083
      %v1085 = vpop.f32.mrb[0].mxu0
      %v1086 = vpop.f32.mrb[0].mxu0
      %v1087 = vadd.f32 %v1039, %v1086
      %v1088 = vpop.f32.mrb[0].mxu0
      %1089 = vmatprep.mubr.bf16.mxu0 0
      %1090 = vmatmul.mubr.bf16.gmra.mrb[0].mxu0 %v801
      %v1091 = vpop.f32.mrb[0].mxu0
      %v1092 = vadd.f32 %v1044, %v1091
      %v1093 = vpop.f32.mrb[0].mxu0
      %v1094 = vpop.f32.mrb[0].mxu0
      %v1095 = vpop.f32.mrb[0].mxu0
      %1096 = vdwg.mxu0
      %v1097 = vrot.slane %v764, 6
      %v1098 = vrot.slane %v768, 6
      %v1099 = vrot.slane %v774, 6
      %v1100 = vsel %vm353, %v1098, %v1099
      %v1101 = vsel %vm353, %v1097, %v1098
      %v1102 = vsel %vm353, %v1099, %v1097
      %v1103 = vmul.f32 %v1102, %v347
      %v1104 = vmul.f32 %v1101, %v348
      %v1105 = vmul.f32 %v1100, %v349
      %v1106 = vpack.c.bf16 %v1104, %v1103
      %v1107 = vpack.c.bf16 %v1105, %v1105
      %v1108 = vrot.slane %v764, 7
      %v1109 = vrot.slane %v768, 7
      %v1110 = vrot.slane %v774, 7
      %v1111 = vsel %vm365, %v1109, %v1110
      %v1112 = vsel %vm365, %v1108, %v1109
      %v1113 = vsel %vm365, %v1110, %v1108
      %v1114 = vmul.f32 %v1113, %v341
      %v1115 = vmul.f32 %v1112, %v342
      %v1116 = vmul.f32 %v1111, %v343
      %v1117 = vpack.c.bf16 %v1115, %v1114
      %v1118 = vpack.c.bf16 %v1116, %v1116
      %v1119 = vpack.c.bf16 %v768, %v764
      %v1120 = vpack.c.bf16 %v774, %v774
      %v1121 = vld [vmem:[%s5] sm:$0xf]
      %v1122 = vld [vmem:[%s5 + $0x4] sm:$0xf]
      %v1123 = vld [vmem:[%s5 + $0x8] sm:$0xf]
      %v1124 = vld [vmem:[%s5 + $0xc] sm:$0xf]
      %v1125 = vld [vmem:[%s5 + $0x10] sm:$0xf]
      %v1126 = vld [vmem:[%s5 + $0x14] sm:$0xf]
      %v1127 = vld [vmem:[%s5 + $0x18] sm:$0xf]
      %v1128 = vld [vmem:[%s5 + $0x1c] sm:$0xf]
      %v1129 = vld [vmem:[%s5 + $0x20] sm:$0xf]
      %v1130 = vld [vmem:[%s5 + $0x24] sm:$0xf]
      %v1131 = vld [vmem:[%s5 + $0x28] sm:$0xf]
      %v1132 = vld [vmem:[%s5 + $0x2c] sm:$0xf]
      %v1133 = vld [vmem:[%s5 + $0x30] sm:$0xf]
      %v1134 = vld [vmem:[%s5 + $0x34] sm:$0xf]
      %v1135 = vld [vmem:[%s5 + $0x38] sm:$0xf]
      %v1136 = vld [vmem:[%s5 + $0x3c] sm:$0xf]
      %v1137 = vld [vmem:[%s5 + $0x40] sm:$0xf]
      %v1138 = vld [vmem:[%s5 + $0x44] sm:$0xf]
      %v1139 = vld [vmem:[%s5 + $0x48] sm:$0xf]
      %v1140 = vld [vmem:[%s5 + $0x4c] sm:$0xf]
      %v1141 = vld [vmem:[%s5 + $0x50] sm:$0xf]
      %v1142 = vld [vmem:[%s5 + $0x54] sm:$0xf]
      %v1143 = vld [vmem:[%s5 + $0x58] sm:$0xf]
      %v1144 = vld [vmem:[%s5 + $0x5c] sm:$0xf]
      %v1145 = vld [vmem:[%s5 + $0x60] sm:$0xf]
      %v1146 = vld [vmem:[%s5 + $0x64] sm:$0xf]
      %v1147 = vld [vmem:[%s5 + $0x68] sm:$0xf]
      %v1148 = vld [vmem:[%s5 + $0x6c] sm:$0xf]
      %v1149 = vld [vmem:[%s5 + $0x70] sm:$0xf]
      %v1150 = vld [vmem:[%s5 + $0x74] sm:$0xf]
      %v1151 = vld [vmem:[%s5 + $0x78] sm:$0xf]
      %v1152 = vld [vmem:[%s5 + $0x7c] sm:$0xf]
      %v1153 = vld [vmem:[%s5 + $0x80] sm:$0xf]
      %v1154 = vld [vmem:[%s5 + $0x84] sm:$0xf]
      %v1155 = vld [vmem:[%s5 + $0x88] sm:$0xf]
      %v1156 = vld [vmem:[%s5 + $0x8c] sm:$0xf]
      %v1157 = vld [vmem:[%s5 + $0x90] sm:$0xf]
      %v1158 = vld [vmem:[%s5 + $0x94] sm:$0xf]
      %v1159 = vld [vmem:[%s5 + $0x98] sm:$0xf]
      %v1160 = vld [vmem:[%s5 + $0x9c] sm:$0xf]
      %v1161 = vld [vmem:[%s5 + $0xa0] sm:$0xf]
      %v1162 = vld [vmem:[%s5 + $0xa4] sm:$0xf]
      %v1163 = vld [vmem:[%s5 + $0xa8] sm:$0xf]
      %v1164 = vld [vmem:[%s5 + $0xac] sm:$0xf]
      %v1165 = vld [vmem:[%s5 + $0xb0] sm:$0xf]
      %v1166 = vld [vmem:[%s5 + $0xb4] sm:$0xf]
      %v1167 = vld [vmem:[%s5 + $0xb8] sm:$0xf]
      %v1168 = vld [vmem:[%s5 + $0xbc] sm:$0xf]
      %v1169 = vld [vmem:[%s6] sm:$0x1]
      %v1171 = vlaneseq
      %v1172 = vshrl.u32 %v1171, 7
      %v1173 = vsub.s32 0, %v1172
      %v1174 = vrot.slane %v1169, %v1173
      %v1224 = vunpack.c.l.b16 %v1121
      %v1225 = vunpack.c.l.b16 %v1122
      %v1226 = vunpack.c.l.b16 %v1123
      %v1227 = vunpack.c.l.b16 %v1124
      %v1228 = vunpack.c.l.b16 %v1125
      %v1229 = vunpack.c.l.b16 %v1126
      %v1230 = vunpack.c.l.b16 %v1127
      %v1231 = vunpack.c.l.b16 %v1128
      %v1232 = vunpack.c.l.b16 %v1129
      %v1233 = vunpack.c.l.b16 %v1130
      %v1234 = vunpack.c.l.b16 %v1131
      %v1235 = vunpack.c.l.b16 %v1132
      %v1236 = vunpack.c.l.b16 %v1133
      %v1237 = vunpack.c.l.b16 %v1134
      %v1238 = vunpack.c.l.b16 %v1135
      %v1239 = vunpack.c.l.b16 %v1136
      %v1240 = vunpack.c.l.b16 %v1137
      %v1241 = vunpack.c.l.b16 %v1138
      %v1242 = vunpack.c.l.b16 %v1139
      %v1243 = vunpack.c.l.b16 %v1140
      %v1244 = vunpack.c.l.b16 %v1141
      %v1245 = vunpack.c.l.b16 %v1142
      %v1246 = vunpack.c.l.b16 %v1143
      %v1247 = vunpack.c.l.b16 %v1144
      %v1248 = vunpack.c.l.b16 %v1145
      %v1249 = vunpack.c.l.b16 %v1146
      %v1250 = vunpack.c.l.b16 %v1147
      %v1251 = vunpack.c.l.b16 %v1148
      %v1252 = vunpack.c.l.b16 %v1149
      %v1253 = vunpack.c.l.b16 %v1150
      %v1254 = vunpack.c.l.b16 %v1151
      %v1255 = vunpack.c.l.b16 %v1152
      %v1256 = vunpack.c.l.b16 %v1153
      %v1257 = vunpack.c.l.b16 %v1154
      %v1258 = vunpack.c.l.b16 %v1155
      %v1259 = vunpack.c.l.b16 %v1156
      %v1260 = vunpack.c.l.b16 %v1157
      %v1261 = vunpack.c.l.b16 %v1158
      %v1262 = vunpack.c.l.b16 %v1159
      %v1263 = vunpack.c.l.b16 %v1160
      %v1264 = vunpack.c.l.b16 %v1161
      %v1265 = vunpack.c.l.b16 %v1162
      %v1266 = vunpack.c.l.b16 %v1163
      %v1267 = vunpack.c.l.b16 %v1164
      %v1268 = vunpack.c.l.b16 %v1165
      %v1269 = vunpack.c.l.b16 %v1166
      %v1270 = vunpack.c.l.b16 %v1167
      %v1271 = vunpack.c.l.b16 %v1168
      %v1272 = vpack.c.b16 %v1225, %v1224
      %v1273 = vpack.c.b16 %v1227, %v1226
      %v1274 = vpack.c.b16 %v1229, %v1228
      %v1275 = vpack.c.b16 %v1231, %v1230
      %v1276 = vpack.c.b16 %v1233, %v1232
      %v1277 = vpack.c.b16 %v1235, %v1234
      %v1278 = vpack.c.b16 %v1237, %v1236
      %v1279 = vpack.c.b16 %v1239, %v1238
      %v1280 = vpack.c.b16 %v1241, %v1240
      %v1281 = vpack.c.b16 %v1243, %v1242
      %v1282 = vpack.c.b16 %v1245, %v1244
      %v1283 = vpack.c.b16 %v1247, %v1246
      %v1284 = vpack.c.b16 %v1249, %v1248
      %v1285 = vpack.c.b16 %v1251, %v1250
      %v1286 = vpack.c.b16 %v1253, %v1252
      %v1287 = vpack.c.b16 %v1255, %v1254
      %v1288 = vpack.c.b16 %v1257, %v1256
      %v1289 = vpack.c.b16 %v1259, %v1258
      %v1290 = vpack.c.b16 %v1261, %v1260
      %v1291 = vpack.c.b16 %v1263, %v1262
      %v1292 = vpack.c.b16 %v1265, %v1264
      %v1293 = vpack.c.b16 %v1267, %v1266
      %v1294 = vpack.c.b16 %v1269, %v1268
      %v1295 = vpack.c.b16 %v1271, %v1270
      %1320 = vmatprep.subr.bf16.mxu0 0
      %1321 = vmatpush1.bf16.msra.mxu0 %v1272
      %1322 = vmatprep.subr.bf16.mxu0 0
      %1323 = vmatpush1.bf16.msra.mxu0 %v1273
      %1324 = vmatprep.subr.bf16.mxu0 0
      %1325 = vmatpush1.bf16.msra.mxu0 %v1274
      %1326 = vmatprep.subr.bf16.mxu0 0
      %1327 = vmatpush1.bf16.msra.mxu0 %v1275
      %1328 = vmatprep.subr.bf16.mxu0 0
      %1329 = vmatpush1.bf16.msra.mxu0 %v1276
      %1330 = vmatprep.subr.bf16.mxu0 0
      %1331 = vmatpush1.bf16.msra.mxu0 %v1277
      %1332 = vmatprep.subr.bf16.mxu0 0
      %1333 = vmatpush1.bf16.msra.mxu0 %v1278
      %1334 = vmatprep.subr.bf16.mxu0 0
      %1335 = vmatpush1.bf16.msra.mxu0 %v1279
      %1336 = vmatprep.subr.bf16.mxu0 0
      %1337 = vmatpush1.bf16.msra.mxu0 %v1280
      %1338 = vmatprep.subr.bf16.mxu0 0
      %1339 = vmatpush1.bf16.msra.mxu0 %v1281
      %1340 = vmatprep.subr.bf16.mxu0 0
      %1341 = vmatpush1.bf16.msra.mxu0 %v1282
      %1342 = vmatprep.subr.bf16.mxu0 0
      %1343 = vmatpush1.bf16.msra.mxu0 %v1283
      %1344 = vmatprep.subr.bf16.mxu0 0
      %1345 = vmatpush1.bf16.msra.mxu0 %v1284
      %1346 = vmatprep.subr.bf16.mxu0 0
      %1347 = vmatpush1.bf16.msra.mxu0 %v1285
      %1348 = vmatprep.subr.bf16.mxu0 0
      %1349 = vmatpush1.bf16.msra.mxu0 %v1286
      %1350 = vmatprep.subr.bf16.mxu0 0
      %1351 = vmatpush1.bf16.msra.mxu0 %v1287
      %1352 = vmatprep.mubr.bf16.mxu0 %v1117
      %1353 = vmatmul.mubr.bf16.gmra.mrb[0].mxu0 %v1106
      %v1354 = vpop.f32.mrb[0].mxu0
      %v1355 = vadd.f32 %v1174, %v1354
      %v1356 = vpop.f32.mrb[0].mxu0
      %v1357 = vpop.f32.mrb[0].mxu0
      %v1358 = vadd.f32 %v1174, %v1357
      %v1359 = vpop.f32.mrb[0].mxu0
      %1360 = vmatprep.mubr.bf16.mxu0 %v1118
      %1361 = vmatmul.mubr.bf16.gmra.mrb[0].mxu0 %v1107
      %v1362 = vpop.f32.mrb[0].mxu0
      %v1363 = vadd.f32 %v1174, %v1362
      %v1364 = vpop.f32.mrb[0].mxu0
      %v1365 = vpop.f32.mrb[0].mxu0
      %v1366 = vpop.f32.mrb[0].mxu0
      %1367 = vdwg.mxu0
      %1368 = vmatprep.subr.bf16.mxu0 0
      %1369 = vmatpush1.bf16.msra.mxu0 %v1288
      %1370 = vmatprep.subr.bf16.mxu0 0
      %1371 = vmatpush1.bf16.msra.mxu0 %v1289
      %1372 = vmatprep.subr.bf16.mxu0 0
      %1373 = vmatpush1.bf16.msra.mxu0 %v1290
      %1374 = vmatprep.subr.bf16.mxu0 0
      %1375 = vmatpush1.bf16.msra.mxu0 %v1291
      %1376 = vmatprep.subr.bf16.mxu0 0
      %1377 = vmatpush1.bf16.msra.mxu0 %v1292
      %1378 = vmatprep.subr.bf16.mxu0 0
      %1379 = vmatpush1.bf16.msra.mxu0 %v1293
      %1380 = vmatprep.subr.bf16.mxu0 0
      %1381 = vmatpush1.bf16.msra.mxu0 %v1294
      %1382 = vmatprep.subr.bf16.mxu0 0
      %1383 = vmatpush1.bf16.msra.mxu0 %v1295
      %1384 = vmatprep.subr.bf16.mxu0 0
      %1385 = vmatpush1.bf16.msra.mxu0 0
      %1386 = vmatprep.subr.bf16.mxu0 0
      %1387 = vmatpush1.bf16.msra.mxu0 0
      %1388 = vmatprep.subr.bf16.mxu0 0
      %1389 = vmatpush1.bf16.msra.mxu0 0
      %1390 = vmatprep.subr.bf16.mxu0 0
      %1391 = vmatpush1.bf16.msra.mxu0 0
      %1392 = vmatprep.subr.bf16.mxu0 0
      %1393 = vmatpush1.bf16.msra.mxu0 0
      %1394 = vmatprep.subr.bf16.mxu0 0
      %1395 = vmatpush1.bf16.msra.mxu0 0
      %1396 = vmatprep.subr.bf16.mxu0 0
      %1397 = vmatpush1.bf16.msra.mxu0 0
      %1398 = vmatprep.subr.bf16.mxu0 0
      %1399 = vmatpush1.bf16.msra.mxu0 0
      %1400 = vmatprep.mubr.bf16.mxu0 0
      %1401 = vmatmul.mubr.bf16.gmra.mrb[0].mxu0 %v1119
      %v1402 = vpop.f32.mrb[0].mxu0
      %v1403 = vadd.f32 %v1355, %v1402
      %v1404 = vpop.f32.mrb[0].mxu0
      %v1405 = vpop.f32.mrb[0].mxu0
      %v1406 = vadd.f32 %v1358, %v1405
      %v1407 = vpop.f32.mrb[0].mxu0
      %1408 = vmatprep.mubr.bf16.mxu0 0
      %1409 = vmatmul.mubr.bf16.gmra.mrb[0].mxu0 %v1120
      %v1410 = vpop.f32.mrb[0].mxu0
      %v1411 = vadd.f32 %v1363, %v1410
      %v1412 = vpop.f32.mrb[0].mxu0
      %v1413 = vpop.f32.mrb[0].mxu0
      %v1414 = vpop.f32.mrb[0].mxu0
      %1415 = vdwg.mxu0
      %v1416 = vrot.slane %v1084, 6
      %v1417 = vrot.slane %v1087, 6
      %v1418 = vrot.slane %v1092, 6
      %v1419 = vsel %vm353, %v1417, %v1418
      %v1420 = vsel %vm353, %v1416, %v1417
      %v1421 = vsel %vm353, %v1418, %v1416
      %v1422 = vmul.f32 %v1421, %v347
      %v1423 = vmul.f32 %v1420, %v348
      %v1424 = vmul.f32 %v1419, %v349
      %v1425 = vpack.c.bf16 %v1423, %v1422
      %v1426 = vpack.c.bf16 %v1424, %v1424
      %v1427 = vrot.slane %v1084, 7
      %v1428 = vrot.slane %v1087, 7
      %v1429 = vrot.slane %v1092, 7
      %v1430 = vsel %vm365, %v1428, %v1429
      %v1431 = vsel %vm365, %v1427, %v1428
      %v1432 = vsel %vm365, %v1429, %v1427
      %v1433 = vmul.f32 %v1432, %v341
      %v1434 = vmul.f32 %v1431, %v342
      %v1435 = vmul.f32 %v1430, %v343
      %v1436 = vpack.c.bf16 %v1434, %v1433
      %v1437 = vpack.c.bf16 %v1435, %v1435
      %v1438 = vpack.c.bf16 %v1087, %v1084
      %v1439 = vpack.c.bf16 %v1092, %v1092
      %s1440 = scalar_lea.vmem %s3, 192
      %v1441 = vld [vmem:[%s1440] sm:$0xf]
      %v1442 = vld [vmem:[%s1440 + $0x4] sm:$0xf]
      %v1443 = vld [vmem:[%s1440 + $0x8] sm:$0xf]
      %v1444 = vld [vmem:[%s1440 + $0xc] sm:$0xf]
      %v1445 = vld [vmem:[%s1440 + $0x10] sm:$0xf]
      %v1446 = vld [vmem:[%s1440 + $0x14] sm:$0xf]
      %v1447 = vld [vmem:[%s1440 + $0x18] sm:$0xf]
      %v1448 = vld [vmem:[%s1440 + $0x1c] sm:$0xf]
      %v1449 = vld [vmem:[%s1440 + $0x20] sm:$0xf]
      %v1450 = vld [vmem:[%s1440 + $0x24] sm:$0xf]
      %v1451 = vld [vmem:[%s1440 + $0x28] sm:$0xf]
      %v1452 = vld [vmem:[%s1440 + $0x2c] sm:$0xf]
      %v1453 = vld [vmem:[%s1440 + $0x30] sm:$0xf]
      %v1454 = vld [vmem:[%s1440 + $0x34] sm:$0xf]
      %v1455 = vld [vmem:[%s1440 + $0x38] sm:$0xf]
      %v1456 = vld [vmem:[%s1440 + $0x3c] sm:$0xf]
      %v1457 = vld [vmem:[%s1440 + $0x40] sm:$0xf]
      %v1458 = vld [vmem:[%s1440 + $0x44] sm:$0xf]
      %v1459 = vld [vmem:[%s1440 + $0x48] sm:$0xf]
      %v1460 = vld [vmem:[%s1440 + $0x4c] sm:$0xf]
      %v1461 = vld [vmem:[%s1440 + $0x50] sm:$0xf]
      %v1462 = vld [vmem:[%s1440 + $0x54] sm:$0xf]
      %v1463 = vld [vmem:[%s1440 + $0x58] sm:$0xf]
      %v1464 = vld [vmem:[%s1440 + $0x5c] sm:$0xf]
      %v1465 = vld [vmem:[%s1440 + $0x60] sm:$0xf]
      %v1466 = vld [vmem:[%s1440 + $0x64] sm:$0xf]
      %v1467 = vld [vmem:[%s1440 + $0x68] sm:$0xf]
      %v1468 = vld [vmem:[%s1440 + $0x6c] sm:$0xf]
      %v1469 = vld [vmem:[%s1440 + $0x70] sm:$0xf]
      %v1470 = vld [vmem:[%s1440 + $0x74] sm:$0xf]
      %v1471 = vld [vmem:[%s1440 + $0x78] sm:$0xf]
      %v1472 = vld [vmem:[%s1440 + $0x7c] sm:$0xf]
      %v1473 = vld [vmem:[%s1440 + $0x80] sm:$0xf]
      %v1474 = vld [vmem:[%s1440 + $0x84] sm:$0xf]
      %v1475 = vld [vmem:[%s1440 + $0x88] sm:$0xf]
      %v1476 = vld [vmem:[%s1440 + $0x8c] sm:$0xf]
      %v1477 = vld [vmem:[%s1440 + $0x90] sm:$0xf]
      %v1478 = vld [vmem:[%s1440 + $0x94] sm:$0xf]
      %v1479 = vld [vmem:[%s1440 + $0x98] sm:$0xf]
      %v1480 = vld [vmem:[%s1440 + $0x9c] sm:$0xf]
      %v1481 = vld [vmem:[%s1440 + $0xa0] sm:$0xf]
      %v1482 = vld [vmem:[%s1440 + $0xa4] sm:$0xf]
      %v1483 = vld [vmem:[%s1440 + $0xa8] sm:$0xf]
      %v1484 = vld [vmem:[%s1440 + $0xac] sm:$0xf]
      %v1485 = vld [vmem:[%s1440 + $0xb0] sm:$0xf]
      %v1486 = vld [vmem:[%s1440 + $0xb4] sm:$0xf]
      %v1487 = vld [vmem:[%s1440 + $0xb8] sm:$0xf]
      %v1488 = vld [vmem:[%s1440 + $0xbc] sm:$0xf]
      %s1489 = scalar_lea.vmem %s4, 1
      %v1490 = vld [vmem:[%s1489] sm:$0x1]
      %v1492 = vlaneseq
      %v1493 = vshrl.u32 %v1492, 7
      %v1494 = vsub.s32 0, %v1493
      %v1495 = vrot.slane %v1490, %v1494
      %v1545 = vunpack.c.l.b16 %v1441
      %v1546 = vunpack.c.l.b16 %v1442
      %v1547 = vunpack.c.l.b16 %v1443
      %v1548 = vunpack.c.l.b16 %v1444
      %v1549 = vunpack.c.l.b16 %v1445
      %v1550 = vunpack.c.l.b16 %v1446
      %v1551 = vunpack.c.l.b16 %v1447
      %v1552 = vunpack.c.l.b16 %v1448
      %v1553 = vunpack.c.l.b16 %v1449
      %v1554 = vunpack.c.l.b16 %v1450
      %v1555 = vunpack.c.l.b16 %v1451
      %v1556 = vunpack.c.l.b16 %v1452
      %v1557 = vunpack.c.l.b16 %v1453
      %v1558 = vunpack.c.l.b16 %v1454
      %v1559 = vunpack.c.l.b16 %v1455
      %v1560 = vunpack.c.l.b16 %v1456
      %v1561 = vunpack.c.l.b16 %v1457
      %v1562 = vunpack.c.l.b16 %v1458
      %v1563 = vunpack.c.l.b16 %v1459
      %v1564 = vunpack.c.l.b16 %v1460
      %v1565 = vunpack.c.l.b16 %v1461
      %v1566 = vunpack.c.l.b16 %v1462
      %v1567 = vunpack.c.l.b16 %v1463
      %v1568 = vunpack.c.l.b16 %v1464
      %v1569 = vunpack.c.l.b16 %v1465
      %v1570 = vunpack.c.l.b16 %v1466
      %v1571 = vunpack.c.l.b16 %v1467
      %v1572 = vunpack.c.l.b16 %v1468
      %v1573 = vunpack.c.l.b16 %v1469
      %v1574 = vunpack.c.l.b16 %v1470
      %v1575 = vunpack.c.l.b16 %v1471
      %v1576 = vunpack.c.l.b16 %v1472
      %v1577 = vunpack.c.l.b16 %v1473
      %v1578 = vunpack.c.l.b16 %v1474
      %v1579 = vunpack.c.l.b16 %v1475
      %v1580 = vunpack.c.l.b16 %v1476
      %v1581 = vunpack.c.l.b16 %v1477
      %v1582 = vunpack.c.l.b16 %v1478
      %v1583 = vunpack.c.l.b16 %v1479
      %v1584 = vunpack.c.l.b16 %v1480
      %v1585 = vunpack.c.l.b16 %v1481
      %v1586 = vunpack.c.l.b16 %v1482
      %v1587 = vunpack.c.l.b16 %v1483
      %v1588 = vunpack.c.l.b16 %v1484
      %v1589 = vunpack.c.l.b16 %v1485
      %v1590 = vunpack.c.l.b16 %v1486
      %v1591 = vunpack.c.l.b16 %v1487
      %v1592 = vunpack.c.l.b16 %v1488
      %v1593 = vpack.c.b16 %v1546, %v1545
      %v1594 = vpack.c.b16 %v1548, %v1547
      %v1595 = vpack.c.b16 %v1550, %v1549
      %v1596 = vpack.c.b16 %v1552, %v1551
      %v1597 = vpack.c.b16 %v1554, %v1553
      %v1598 = vpack.c.b16 %v1556, %v1555
      %v1599 = vpack.c.b16 %v1558, %v1557
      %v1600 = vpack.c.b16 %v1560, %v1559
      %v1601 = vpack.c.b16 %v1562, %v1561
      %v1602 = vpack.c.b16 %v1564, %v1563
      %v1603 = vpack.c.b16 %v1566, %v1565
      %v1604 = vpack.c.b16 %v1568, %v1567
      %v1605 = vpack.c.b16 %v1570, %v1569
      %v1606 = vpack.c.b16 %v1572, %v1571
      %v1607 = vpack.c.b16 %v1574, %v1573
      %v1608 = vpack.c.b16 %v1576, %v1575
      %v1609 = vpack.c.b16 %v1578, %v1577
      %v1610 = vpack.c.b16 %v1580, %v1579
      %v1611 = vpack.c.b16 %v1582, %v1581
      %v1612 = vpack.c.b16 %v1584, %v1583
      %v1613 = vpack.c.b16 %v1586, %v1585
      %v1614 = vpack.c.b16 %v1588, %v1587
      %v1615 = vpack.c.b16 %v1590, %v1589
      %v1616 = vpack.c.b16 %v1592, %v1591
      %1641 = vmatprep.subr.bf16.mxu0 0
      %1642 = vmatpush1.bf16.msra.mxu0 %v1593
      %1643 = vmatprep.subr.bf16.mxu0 0
      %1644 = vmatpush1.bf16.msra.mxu0 %v1594
      %1645 = vmatprep.subr.bf16.mxu0 0
      %1646 = vmatpush1.bf16.msra.mxu0 %v1595
      %1647 = vmatprep.subr.bf16.mxu0 0
      %1648 = vmatpush1.bf16.msra.mxu0 %v1596
      %1649 = vmatprep.subr.bf16.mxu0 0
      %1650 = vmatpush1.bf16.msra.mxu0 %v1597
      %1651 = vmatprep.subr.bf16.mxu0 0
      %1652 = vmatpush1.bf16.msra.mxu0 %v1598
      %1653 = vmatprep.subr.bf16.mxu0 0
      %1654 = vmatpush1.bf16.msra.mxu0 %v1599
      %1655 = vmatprep.subr.bf16.mxu0 0
      %1656 = vmatpush1.bf16.msra.mxu0 %v1600
      %1657 = vmatprep.subr.bf16.mxu0 0
      %1658 = vmatpush1.bf16.msra.mxu0 %v1601
      %1659 = vmatprep.subr.bf16.mxu0 0
      %1660 = vmatpush1.bf16.msra.mxu0 %v1602
      %1661 = vmatprep.subr.bf16.mxu0 0
      %1662 = vmatpush1.bf16.msra.mxu0 %v1603
      %1663 = vmatprep.subr.bf16.mxu0 0
      %1664 = vmatpush1.bf16.msra.mxu0 %v1604
      %1665 = vmatprep.subr.bf16.mxu0 0
      %1666 = vmatpush1.bf16.msra.mxu0 %v1605
      %1667 = vmatprep.subr.bf16.mxu0 0
      %1668 = vmatpush1.bf16.msra.mxu0 %v1606
      %1669 = vmatprep.subr.bf16.mxu0 0
      %1670 = vmatpush1.bf16.msra.mxu0 %v1607
      %1671 = vmatprep.subr.bf16.mxu0 0
      %1672 = vmatpush1.bf16.msra.mxu0 %v1608
      %1673 = vmatprep.mubr.bf16.mxu0 %v1436
      %1674 = vmatmul.mubr.bf16.gmra.mrb[0].mxu0 %v1425
      %v1675 = vpop.f32.mrb[0].mxu0
      %v1676 = vadd.f32 %v1495, %v1675
      %v1677 = vpop.f32.mrb[0].mxu0
      %v1678 = vpop.f32.mrb[0].mxu0
      %v1679 = vadd.f32 %v1495, %v1678
      %v1680 = vpop.f32.mrb[0].mxu0
      %1681 = vmatprep.mubr.bf16.mxu0 %v1437
      %1682 = vmatmul.mubr.bf16.gmra.mrb[0].mxu0 %v1426
      %v1683 = vpop.f32.mrb[0].mxu0
      %v1684 = vadd.f32 %v1495, %v1683
      %v1685 = vpop.f32.mrb[0].mxu0
      %v1686 = vpop.f32.mrb[0].mxu0
      %v1687 = vpop.f32.mrb[0].mxu0
      %1688 = vdwg.mxu0
      %1689 = vmatprep.subr.bf16.mxu0 0
      %1690 = vmatpush1.bf16.msra.mxu0 %v1609
      %1691 = vmatprep.subr.bf16.mxu0 0
      %1692 = vmatpush1.bf16.msra.mxu0 %v1610
      %1693 = vmatprep.subr.bf16.mxu0 0
      %1694 = vmatpush1.bf16.msra.mxu0 %v1611
      %1695 = vmatprep.subr.bf16.mxu0 0
      %1696 = vmatpush1.bf16.msra.mxu0 %v1612
      %1697 = vmatprep.subr.bf16.mxu0 0
      %1698 = vmatpush1.bf16.msra.mxu0 %v1613
      %1699 = vmatprep.subr.bf16.mxu0 0
      %1700 = vmatpush1.bf16.msra.mxu0 %v1614
      %1701 = vmatprep.subr.bf16.mxu0 0
      %1702 = vmatpush1.bf16.msra.mxu0 %v1615
      %1703 = vmatprep.subr.bf16.mxu0 0
      %1704 = vmatpush1.bf16.msra.mxu0 %v1616
      %1705 = vmatprep.subr.bf16.mxu0 0
      %1706 = vmatpush1.bf16.msra.mxu0 0
      %1707 = vmatprep.subr.bf16.mxu0 0
      %1708 = vmatpush1.bf16.msra.mxu0 0
      %1709 = vmatprep.subr.bf16.mxu0 0
      %1710 = vmatpush1.bf16.msra.mxu0 0
      %1711 = vmatprep.subr.bf16.mxu0 0
      %1712 = vmatpush1.bf16.msra.mxu0 0
      %1713 = vmatprep.subr.bf16.mxu0 0
      %1714 = vmatpush1.bf16.msra.mxu0 0
      %1715 = vmatprep.subr.bf16.mxu0 0
      %1716 = vmatpush1.bf16.msra.mxu0 0
      %1717 = vmatprep.subr.bf16.mxu0 0
      %1718 = vmatpush1.bf16.msra.mxu0 0
      %1719 = vmatprep.subr.bf16.mxu0 0
      %1720 = vmatpush1.bf16.msra.mxu0 0
      %1721 = vmatprep.mubr.bf16.mxu0 0
      %1722 = vmatmul.mubr.bf16.gmra.mrb[0].mxu0 %v1438
      %v1723 = vpop.f32.mrb[0].mxu0
      %v1724 = vadd.f32 %v1676, %v1723
      %v1725 = vpop.f32.mrb[0].mxu0
      %v1726 = vpop.f32.mrb[0].mxu0
      %v1727 = vadd.f32 %v1679, %v1726
      %v1728 = vpop.f32.mrb[0].mxu0
      %1729 = vmatprep.mubr.bf16.mxu0 0
      %1730 = vmatmul.mubr.bf16.gmra.mrb[0].mxu0 %v1439
      %v1731 = vpop.f32.mrb[0].mxu0
      %v1732 = vadd.f32 %v1684, %v1731
      %v1733 = vpop.f32.mrb[0].mxu0
      %v1734 = vpop.f32.mrb[0].mxu0
      %v1735 = vpop.f32.mrb[0].mxu0
      %1736 = vdwg.mxu0
      %v1737 = vrot.slane %v1403, 6
      %v1738 = vrot.slane %v1406, 6
      %v1739 = vrot.slane %v1411, 6
      %v1740 = vsel %vm353, %v1738, %v1739
      %v1741 = vsel %vm353, %v1737, %v1738
      %v1742 = vsel %vm353, %v1739, %v1737
      %v1743 = vmul.f32 %v1742, %v347
      %v1744 = vmul.f32 %v1741, %v348
      %v1745 = vmul.f32 %v1740, %v349
      %v1746 = vpack.c.bf16 %v1744, %v1743
      %v1747 = vpack.c.bf16 %v1745, %v1745
      %v1748 = vrot.slane %v1403, 7
      %v1749 = vrot.slane %v1406, 7
      %v1750 = vrot.slane %v1411, 7
      %v1751 = vsel %vm365, %v1749, %v1750
      %v1752 = vsel %vm365, %v1748, %v1749
      %v1753 = vsel %vm365, %v1750, %v1748
      %v1754 = vmul.f32 %v1753, %v341
      %v1755 = vmul.f32 %v1752, %v342
      %v1756 = vmul.f32 %v1751, %v343
      %v1757 = vpack.c.bf16 %v1755, %v1754
      %v1758 = vpack.c.bf16 %v1756, %v1756
      %v1759 = vpack.c.bf16 %v1406, %v1403
      %v1760 = vpack.c.bf16 %v1411, %v1411
      %s1761 = scalar_lea.vmem %s5, 192
      %v1762 = vld [vmem:[%s1761] sm:$0xf]
      %v1763 = vld [vmem:[%s1761 + $0x4] sm:$0xf]
      %v1764 = vld [vmem:[%s1761 + $0x8] sm:$0xf]
      %v1765 = vld [vmem:[%s1761 + $0xc] sm:$0xf]
      %v1766 = vld [vmem:[%s1761 + $0x10] sm:$0xf]
      %v1767 = vld [vmem:[%s1761 + $0x14] sm:$0xf]
      %v1768 = vld [vmem:[%s1761 + $0x18] sm:$0xf]
      %v1769 = vld [vmem:[%s1761 + $0x1c] sm:$0xf]
      %v1770 = vld [vmem:[%s1761 + $0x20] sm:$0xf]
      %v1771 = vld [vmem:[%s1761 + $0x24] sm:$0xf]
      %v1772 = vld [vmem:[%s1761 + $0x28] sm:$0xf]
      %v1773 = vld [vmem:[%s1761 + $0x2c] sm:$0xf]
      %v1774 = vld [vmem:[%s1761 + $0x30] sm:$0xf]
      %v1775 = vld [vmem:[%s1761 + $0x34] sm:$0xf]
      %v1776 = vld [vmem:[%s1761 + $0x38] sm:$0xf]
      %v1777 = vld [vmem:[%s1761 + $0x3c] sm:$0xf]
      %v1778 = vld [vmem:[%s1761 + $0x40] sm:$0xf]
      %v1779 = vld [vmem:[%s1761 + $0x44] sm:$0xf]
      %v1780 = vld [vmem:[%s1761 + $0x48] sm:$0xf]
      %v1781 = vld [vmem:[%s1761 + $0x4c] sm:$0xf]
      %v1782 = vld [vmem:[%s1761 + $0x50] sm:$0xf]
      %v1783 = vld [vmem:[%s1761 + $0x54] sm:$0xf]
      %v1784 = vld [vmem:[%s1761 + $0x58] sm:$0xf]
      %v1785 = vld [vmem:[%s1761 + $0x5c] sm:$0xf]
      %v1786 = vld [vmem:[%s1761 + $0x60] sm:$0xf]
      %v1787 = vld [vmem:[%s1761 + $0x64] sm:$0xf]
      %v1788 = vld [vmem:[%s1761 + $0x68] sm:$0xf]
      %v1789 = vld [vmem:[%s1761 + $0x6c] sm:$0xf]
      %v1790 = vld [vmem:[%s1761 + $0x70] sm:$0xf]
      %v1791 = vld [vmem:[%s1761 + $0x74] sm:$0xf]
      %v1792 = vld [vmem:[%s1761 + $0x78] sm:$0xf]
      %v1793 = vld [vmem:[%s1761 + $0x7c] sm:$0xf]
      %v1794 = vld [vmem:[%s1761 + $0x80] sm:$0xf]
      %v1795 = vld [vmem:[%s1761 + $0x84] sm:$0xf]
      %v1796 = vld [vmem:[%s1761 + $0x88] sm:$0xf]
      %v1797 = vld [vmem:[%s1761 + $0x8c] sm:$0xf]
      %v1798 = vld [vmem:[%s1761 + $0x90] sm:$0xf]
      %v1799 = vld [vmem:[%s1761 + $0x94] sm:$0xf]
      %v1800 = vld [vmem:[%s1761 + $0x98] sm:$0xf]
      %v1801 = vld [vmem:[%s1761 + $0x9c] sm:$0xf]
      %v1802 = vld [vmem:[%s1761 + $0xa0] sm:$0xf]
      %v1803 = vld [vmem:[%s1761 + $0xa4] sm:$0xf]
      %v1804 = vld [vmem:[%s1761 + $0xa8] sm:$0xf]
      %v1805 = vld [vmem:[%s1761 + $0xac] sm:$0xf]
      %v1806 = vld [vmem:[%s1761 + $0xb0] sm:$0xf]
      %v1807 = vld [vmem:[%s1761 + $0xb4] sm:$0xf]
      %v1808 = vld [vmem:[%s1761 + $0xb8] sm:$0xf]
      %v1809 = vld [vmem:[%s1761 + $0xbc] sm:$0xf]
      %s1810 = scalar_lea.vmem %s6, 1
      %v1811 = vld [vmem:[%s1810] sm:$0x1]
      %v1813 = vlaneseq
      %v1814 = vshrl.u32 %v1813, 7
      %v1815 = vsub.s32 0, %v1814
      %v1816 = vrot.slane %v1811, %v1815
      %v1866 = vunpack.c.l.b16 %v1762
      %v1867 = vunpack.c.l.b16 %v1763
      %v1868 = vunpack.c.l.b16 %v1764
      %v1869 = vunpack.c.l.b16 %v1765
      %v1870 = vunpack.c.l.b16 %v1766
      %v1871 = vunpack.c.l.b16 %v1767
      %v1872 = vunpack.c.l.b16 %v1768
      %v1873 = vunpack.c.l.b16 %v1769
      %v1874 = vunpack.c.l.b16 %v1770
      %v1875 = vunpack.c.l.b16 %v1771
      %v1876 = vunpack.c.l.b16 %v1772
      %v1877 = vunpack.c.l.b16 %v1773
      %v1878 = vunpack.c.l.b16 %v1774
      %v1879 = vunpack.c.l.b16 %v1775
      %v1880 = vunpack.c.l.b16 %v1776
      %v1881 = vunpack.c.l.b16 %v1777
      %v1882 = vunpack.c.l.b16 %v1778
      %v1883 = vunpack.c.l.b16 %v1779
      %v1884 = vunpack.c.l.b16 %v1780
      %v1885 = vunpack.c.l.b16 %v1781
      %v1886 = vunpack.c.l.b16 %v1782
      %v1887 = vunpack.c.l.b16 %v1783
      %v1888 = vunpack.c.l.b16 %v1784
      %v1889 = vunpack.c.l.b16 %v1785
      %v1890 = vunpack.c.l.b16 %v1786
      %v1891 = vunpack.c.l.b16 %v1787
      %v1892 = vunpack.c.l.b16 %v1788
      %v1893 = vunpack.c.l.b16 %v1789
      %v1894 = vunpack.c.l.b16 %v1790
      %v1895 = vunpack.c.l.b16 %v1791
      %v1896 = vunpack.c.l.b16 %v1792
      %v1897 = vunpack.c.l.b16 %v1793
      %v1898 = vunpack.c.l.b16 %v1794
      %v1899 = vunpack.c.l.b16 %v1795
      %v1900 = vunpack.c.l.b16 %v1796
      %v1901 = vunpack.c.l.b16 %v1797
      %v1902 = vunpack.c.l.b16 %v1798
      %v1903 = vunpack.c.l.b16 %v1799
      %v1904 = vunpack.c.l.b16 %v1800
      %v1905 = vunpack.c.l.b16 %v1801
      %v1906 = vunpack.c.l.b16 %v1802
      %v1907 = vunpack.c.l.b16 %v1803
      %v1908 = vunpack.c.l.b16 %v1804
      %v1909 = vunpack.c.l.b16 %v1805
      %v1910 = vunpack.c.l.b16 %v1806
      %v1911 = vunpack.c.l.b16 %v1807
      %v1912 = vunpack.c.l.b16 %v1808
      %v1913 = vunpack.c.l.b16 %v1809
      %v1914 = vpack.c.b16 %v1867, %v1866
      %v1915 = vpack.c.b16 %v1869, %v1868
      %v1916 = vpack.c.b16 %v1871, %v1870
      %v1917 = vpack.c.b16 %v1873, %v1872
      %v1918 = vpack.c.b16 %v1875, %v1874
      %v1919 = vpack.c.b16 %v1877, %v1876
      %v1920 = vpack.c.b16 %v1879, %v1878
      %v1921 = vpack.c.b16 %v1881, %v1880
      %v1922 = vpack.c.b16 %v1883, %v1882
      %v1923 = vpack.c.b16 %v1885, %v1884
      %v1924 = vpack.c.b16 %v1887, %v1886
      %v1925 = vpack.c.b16 %v1889, %v1888
      %v1926 = vpack.c.b16 %v1891, %v1890
      %v1927 = vpack.c.b16 %v1893, %v1892
      %v1928 = vpack.c.b16 %v1895, %v1894
      %v1929 = vpack.c.b16 %v1897, %v1896
      %v1930 = vpack.c.b16 %v1899, %v1898
      %v1931 = vpack.c.b16 %v1901, %v1900
      %v1932 = vpack.c.b16 %v1903, %v1902
      %v1933 = vpack.c.b16 %v1905, %v1904
      %v1934 = vpack.c.b16 %v1907, %v1906
      %v1935 = vpack.c.b16 %v1909, %v1908
      %v1936 = vpack.c.b16 %v1911, %v1910
      %v1937 = vpack.c.b16 %v1913, %v1912
      %1962 = vmatprep.subr.bf16.mxu0 0
      %1963 = vmatpush1.bf16.msra.mxu0 %v1914
      %1964 = vmatprep.subr.bf16.mxu0 0
      %1965 = vmatpush1.bf16.msra.mxu0 %v1915
      %1966 = vmatprep.subr.bf16.mxu0 0
      %1967 = vmatpush1.bf16.msra.mxu0 %v1916
      %1968 = vmatprep.subr.bf16.mxu0 0
      %1969 = vmatpush1.bf16.msra.mxu0 %v1917
      %1970 = vmatprep.subr.bf16.mxu0 0
      %1971 = vmatpush1.bf16.msra.mxu0 %v1918
      %1972 = vmatprep.subr.bf16.mxu0 0
      %1973 = vmatpush1.bf16.msra.mxu0 %v1919
      %1974 = vmatprep.subr.bf16.mxu0 0
      %1975 = vmatpush1.bf16.msra.mxu0 %v1920
      %1976 = vmatprep.subr.bf16.mxu0 0
      %1977 = vmatpush1.bf16.msra.mxu0 %v1921
      %1978 = vmatprep.subr.bf16.mxu0 0
      %1979 = vmatpush1.bf16.msra.mxu0 %v1922
      %1980 = vmatprep.subr.bf16.mxu0 0
      %1981 = vmatpush1.bf16.msra.mxu0 %v1923
      %1982 = vmatprep.subr.bf16.mxu0 0
      %1983 = vmatpush1.bf16.msra.mxu0 %v1924
      %1984 = vmatprep.subr.bf16.mxu0 0
      %1985 = vmatpush1.bf16.msra.mxu0 %v1925
      %1986 = vmatprep.subr.bf16.mxu0 0
      %1987 = vmatpush1.bf16.msra.mxu0 %v1926
      %1988 = vmatprep.subr.bf16.mxu0 0
      %1989 = vmatpush1.bf16.msra.mxu0 %v1927
      %1990 = vmatprep.subr.bf16.mxu0 0
      %1991 = vmatpush1.bf16.msra.mxu0 %v1928
      %1992 = vmatprep.subr.bf16.mxu0 0
      %1993 = vmatpush1.bf16.msra.mxu0 %v1929
      %1994 = vmatprep.mubr.bf16.mxu0 %v1757
      %1995 = vmatmul.mubr.bf16.gmra.mrb[0].mxu0 %v1746
      %v1996 = vpop.f32.mrb[0].mxu0
      %v1997 = vadd.f32 %v1816, %v1996
      %v1998 = vpop.f32.mrb[0].mxu0
      %v1999 = vpop.f32.mrb[0].mxu0
      %v2000 = vadd.f32 %v1816, %v1999
      %v2001 = vpop.f32.mrb[0].mxu0
      %2002 = vmatprep.mubr.bf16.mxu0 %v1758
      %2003 = vmatmul.mubr.bf16.gmra.mrb[0].mxu0 %v1747
      %v2004 = vpop.f32.mrb[0].mxu0
      %v2005 = vadd.f32 %v1816, %v2004
      %v2006 = vpop.f32.mrb[0].mxu0
      %v2007 = vpop.f32.mrb[0].mxu0
      %v2008 = vpop.f32.mrb[0].mxu0
      %2009 = vdwg.mxu0
      %2010 = vmatprep.subr.bf16.mxu0 0
      %2011 = vmatpush1.bf16.msra.mxu0 %v1930
      %2012 = vmatprep.subr.bf16.mxu0 0
      %2013 = vmatpush1.bf16.msra.mxu0 %v1931
      %2014 = vmatprep.subr.bf16.mxu0 0
      %2015 = vmatpush1.bf16.msra.mxu0 %v1932
      %2016 = vmatprep.subr.bf16.mxu0 0
      %2017 = vmatpush1.bf16.msra.mxu0 %v1933
      %2018 = vmatprep.subr.bf16.mxu0 0
      %2019 = vmatpush1.bf16.msra.mxu0 %v1934
      %2020 = vmatprep.subr.bf16.mxu0 0
      %2021 = vmatpush1.bf16.msra.mxu0 %v1935
      %2022 = vmatprep.subr.bf16.mxu0 0
      %2023 = vmatpush1.bf16.msra.mxu0 %v1936
      %2024 = vmatprep.subr.bf16.mxu0 0
      %2025 = vmatpush1.bf16.msra.mxu0 %v1937
      %2026 = vmatprep.subr.bf16.mxu0 0
      %2027 = vmatpush1.bf16.msra.mxu0 0
      %2028 = vmatprep.subr.bf16.mxu0 0
      %2029 = vmatpush1.bf16.msra.mxu0 0
      %2030 = vmatprep.subr.bf16.mxu0 0
      %2031 = vmatpush1.bf16.msra.mxu0 0
      %2032 = vmatprep.subr.bf16.mxu0 0
      %2033 = vmatpush1.bf16.msra.mxu0 0
      %2034 = vmatprep.subr.bf16.mxu0 0
      %2035 = vmatpush1.bf16.msra.mxu0 0
      %2036 = vmatprep.subr.bf16.mxu0 0
      %2037 = vmatpush1.bf16.msra.mxu0 0
      %2038 = vmatprep.subr.bf16.mxu0 0
      %2039 = vmatpush1.bf16.msra.mxu0 0
      %2040 = vmatprep.subr.bf16.mxu0 0
      %2041 = vmatpush1.bf16.msra.mxu0 0
      %2042 = vmatprep.mubr.bf16.mxu0 0
      %2043 = vmatmul.mubr.bf16.gmra.mrb[0].mxu0 %v1759
      %v2044 = vpop.f32.mrb[0].mxu0
      %v2045 = vadd.f32 %v1997, %v2044
      %v2046 = vpop.f32.mrb[0].mxu0
      %v2047 = vpop.f32.mrb[0].mxu0
      %v2048 = vadd.f32 %v2000, %v2047
      %v2049 = vpop.f32.mrb[0].mxu0
      %2050 = vmatprep.mubr.bf16.mxu0 0
      %2051 = vmatmul.mubr.bf16.gmra.mrb[0].mxu0 %v1760
      %v2052 = vpop.f32.mrb[0].mxu0
      %v2053 = vadd.f32 %v2005, %v2052
      %v2054 = vpop.f32.mrb[0].mxu0
      %v2055 = vpop.f32.mrb[0].mxu0
      %v2056 = vpop.f32.mrb[0].mxu0
      %2057 = vdwg.mxu0
      %v2058 = vxor.u32 %v1724, 2147483648
      %v2059 = vxor.u32 %v1727, 2147483648
      %v2060 = vxor.u32 %v1732, 2147483648
      %v2061 = vmul.f32 %v2058, 1.442695
      %v2062 = vpow.pop %v2061
      %v2063 = vmul.f32 %v2059, 1.442695
      %v2064 = vpow.pop %v2063
      %v2065 = vmul.f32 %v2060, 1.442695
      %v2066 = vpow.pop %v2065
      %v2067 = vadd.f32 %v2062, 1.0
      %v2068 = vadd.f32 %v2064, 1.0
      %v2069 = vadd.f32 %v2066, 1.0
      %v2070 = vrcp.pop %v2067
      %v2071 = vmul.f32 1.0, %v2070
      %v2072 = vrcp.pop %v2068
      %v2073 = vmul.f32 1.0, %v2072
      %v2074 = vrcp.pop %v2069
      %v2075 = vmul.f32 1.0, %v2074
      %v2076 = vtanh.pop %v2045
      %v2077 = vtanh.pop %v2048
      %v2078 = vtanh.pop %v2053
      %v2079 = vmul.f32 %v2071, %v2076
      %v2080 = vmul.f32 %v2073, %v2077
      %v2081 = vmul.f32 %v2075, %v2078
      %v2082 = vadd.f32 %v283, %v2079
      %v2083 = vadd.f32 %v284, %v2080
      %v2084 = vadd.f32 %v285, %v2081
      %2085 = vst [vmem:[%s280] sm:$0xff] %v2082
      %2086 = vst [vmem:[%s280 + $0x8] sm:$0xff] %v2083
      %2087 = vst [vmem:[%s280 + $0x10] sm:$0xff] %v2084
      %s2088 = smul.u32 3, %s18
      %p2089 = scmp.lt.s32.totalorder %s2088, 11
      %s2090 = scalar_select %p2089, %s2088, 11
      %s2091 = smul.addr %s2090, 8
      %s2092 = scalar_lea.vmem %s7, %s2091
      // Predicated region
      $region49: #{encoder_pallas.1} parent=47 // pred_check
        %p2093 = pneg %p188
      $region50: #{encoder_pallas.1} parent=47 // pred_check_branch
        %2095 = sbr.rel (%p2093) target = $region52
      $region51: #{encoder_pallas.1} parent=47 // pred_region
        %s2096 = smul.u32 3, %s18
      $region52: #{encoder_pallas.1} parent=47 // pred_fallthru
        _
    $region48: #{encoder_pallas.1} parent=5 // pred_fallthru
      _
    %p2097 = scmp.le.s32.totalorder 2, %s13
    // Predicated region
    $region53: #{encoder_pallas.1} parent=5 // pred_check
      %p2098 = pneg %p2097
    $region54: #{encoder_pallas.1} parent=5 // pred_check_branch
      %2100 = sbr.rel (%p2098) target = $region56
    $region55: #{encoder_pallas.1} parent=5 // pred_region
      %s2101 = ssub.s32 %s13, 2
      // Predicated region
      $region57: #{encoder_pallas.1} parent=55 // pred_check
        %p2102 = pneg %p194
      $region58: #{encoder_pallas.1} parent=55 // pred_check_branch
        %2104 = sbr.rel (%p2102) target = $region60
      $region59: #{encoder_pallas.1} parent=55 // pred_region
        %s2105 = smul.u32 3, %s19
        %p2106 = scmp.lt.s32.totalorder %s2105, 11
        %s2107 = scalar_select %p2106, %s2105, 11
        %s2108 = smul.addr %s2107, 8
        %s2109 = scalar_lea.vmem %s7, %s2108
      $region60: #{encoder_pallas.1} parent=55 // pred_fallthru
        _
    $region56: #{encoder_pallas.1} parent=5 // pred_fallthru
      _
  $region6: #{encoder_pallas.1} parent=0 // loop_footer
    %s17 = sadd.s32 1, %s13
  $region7: #{encoder_pallas.1} parent=0 // loop_footer_branch
    %12 = sbr.rel target = $region3
  $region8: #{encoder_pallas.1} parent=0 // loop_exit
    _

</llo_original>
